<compile_context>
chip_gen: v6e
topology: v6e:2x2x1
jax: 0.10.0
libtpu: 0.0.40
codegen_flags: <defaults>
</compile_context>

<pallas_src>
import functools

import jax
import jax.numpy as jnp
from jax.experimental import pallas as pl
from jax.experimental.pallas import tpu as pltpu


def _leaky_relu(x, slope=0.01):
    return jnp.where(x >= 0, x, slope * x)


def lstm_fc_kernel(x_ref, wih_ref, whh_ref, b_ref,
                   w1_ref, b1_ref, w2_ref, b2_ref,
                   out_ref, gx_ref, *, seq_len):
    """Whole LSTMModel forward in one kernel invocation.

    x_ref   : (S*B, I)  bf16, time-major flattened; rows t*B:(t+1)*B = timestep t
    wih_ref : (I, 4H)   bf16, W_ih^T, gate columns permuted to [i, f, o, g]
    whh_ref : (H, 4H)   bf16, W_hh^T, same permutation
    b_ref   : (1, 4H)   f32,  b_ih + b_hh, same permutation
    w1_ref  : (H, F1)   bf16; b1_ref: (1, F1) f32
    w2_ref  : (O, F1)   f32 (PyTorch-native layout; used on the VPU, not MXU)
    b2_ref  : (1, O)    f32
    gx_ref  : (S*B, 4H) f32 VMEM scratch holding the hoisted input projection
    """
    B = out_ref.shape[0]
    H = whh_ref.shape[0]

    # ---- Stage 1: input projection for ALL timesteps as one big MXU matmul.
    # bf16 x bf16 -> f32 accumulate (native MXU path, no f32-emulation passes).
    # NOTE: the whole-ref store creates a conservative ordering edge before the
    # first pl.ds read in step 0; at S*B=64 this is a few hundred cycles.
    gx_ref[...] = (
        jnp.dot(x_ref[...], wih_ref[...], preferred_element_type=jnp.float32)
        + b_ref[...])

    # ---- Stage 2: serial recurrence; only h @ W_hh^T sits on the h-chain.
    def step(t, carry):
        h, c = carry                                   # f32 (B, H)
        row = pl.multiple_of(t * B, B)
        gates = gx_ref[pl.ds(row, B), :] + jnp.dot(
            h.astype(jnp.bfloat16), whh_ref[...],
            preferred_element_type=jnp.float32)        # (B, 4H) f32
        # Columns pre-permuted to [i, f, o, g]:
        #   sigmoid on one contiguous (B, 3H) slab, tanh on one (B, H) slab.
        # sigmoid(x) == 0.5 * (tanh(0.5 x) + 1): one EUP op per element.
        # All gate math stays f32 (v5e VPU/EUP has no bf16 path).
        sfo = 0.5 * (jnp.tanh(0.5 * gates[:, :3 * H]) + 1.0)
        g_g = jnp.tanh(gates[:, 3 * H:])
        i_g = sfo[:, 0 * H:1 * H]
        f_g = sfo[:, 1 * H:2 * H]
        o_g = sfo[:, 2 * H:3 * H]
        c_new = f_g * c + i_g * g_g
        h_new = o_g * jnp.tanh(c_new)
        return h_new, c_new

    h0 = jnp.zeros((B, H), jnp.float32)
    h, _ = jax.lax.fori_loop(0, seq_len, step, (h0, h0), unroll=True)

    # ---- Stage 3: FC head on the final hidden state.
    y1 = _leaky_relu(
        jnp.dot(h.astype(jnp.bfloat16), w1_ref[...],
                preferred_element_type=jnp.float32) + b1_ref[...])
    # TODO(synk): nn.Dropout(0.2) is identity at inference; no RNG mask applied.
    # Final Linear has N = O = 1: VPU multiply + lane reduction instead of a
    # 1-column MXU matmul (avoids full fill/drain on the kernel tail).
    # (Assumes O == 1 as in the module spec; for larger O switch back to a dot.)
    y2 = jnp.sum(y1 * w2_ref[...], axis=-1, keepdims=True) + b2_ref[...]
    out_ref[...] = _leaky_relu(y2).astype(out_ref.dtype)


@jax.jit
def lstm_model_forward(x, wih_t, whh_t, b, w1_t, b1, w2, b2):
    """x: (B, S, I) batch_first float32; weights already in kernel layout.

    Returns (B, output_size) float32.
    """
    B, S, I = x.shape
    H = whh_t.shape[0]
    O = w2.shape[0]

    # Time-major, flattened, cast to bf16 (MXU-native operand; halves x's VMEM
    # footprint).  The transpose+reshape is a separate XLA copy of x —
    # negligible at this size (~16 KiB); at scale use strided pl.ds reads
    # inside the kernel instead.
    x_flat = jnp.transpose(x, (1, 0, 2)).reshape(S * B, I).astype(jnp.bfloat16)

    kernel = functools.partial(lstm_fc_kernel, seq_len=S)
    vmem_spec = pl.BlockSpec(memory_space=pltpu.MemorySpace.VMEM)

    return pl.pallas_call(
        kernel,
        out_shape=jax.ShapeDtypeStruct((B, O), jnp.float32),
        in_specs=[vmem_spec] * 8,
        out_specs=vmem_spec,
        # Single-buffered f32 GX scratch: 128 KiB here.  Guard for v7x (64 MiB
        # physical / 32 MiB scoped VMEM): once S*B*4H*4 bytes approaches tens
        # of MiB, chunk stages 1+2 over time blocks instead of materializing GX.
        scratch_shapes=[pltpu.VMEM((S * B, 4 * H), jnp.float32)],
    )(x_flat, wih_t, whh_t, b, w1_t, b1, w2, b2)


def init_params(key, input_size, hidden_size, output_size, fc_hidden=128):
    """PyTorch-equivalent params, f32, gate order [i, f, g, o] (reference layout)."""
    ks = jax.random.split(key, 8)
    H = hidden_size
    bound = 1.0 / jnp.sqrt(H)

    def u(k, shape, bnd):
        return jax.random.uniform(k, shape, jnp.float32, -bnd, bnd)

    w_ih = u(ks[0], (4 * H, input_size), bound)       # PyTorch weight_ih_l0
    w_hh = u(ks[1], (4 * H, H), bound)                # PyTorch weight_hh_l0
    b_ih = u(ks[2], (4 * H,), bound)
    b_hh = u(ks[3], (4 * H,), bound)
    w1 = u(ks[4], (fc_hidden, H), bound)              # Linear(hidden, 128)
    b1 = u(ks[5], (fc_hidden,), bound)
    bound2 = 1.0 / jnp.sqrt(fc_hidden)
    w2 = u(ks[6], (output_size, fc_hidden), bound2)   # Linear(128, output_size)
    b2 = u(ks[7], (output_size,), bound2)

    return dict(
        wih_t=w_ih.T,                                 # (I, 4H) f32
        whh_t=w_hh.T,                                 # (H, 4H) f32
        b=(b_ih + b_hh).reshape(1, 4 * H),            # (1, 4H) f32
        w1_t=w1.T,                                    # (H, 128) f32
        b1=b1.reshape(1, fc_hidden),                  # (1, 128) f32
        w2=w2,                                        # (O, 128) f32
        b2=b2.reshape(1, output_size),                # (1, O)  f32
    )


def prepare_kernel_params(p):
    """Offline: gate-column permutation [i,f,g,o] -> [i,f,o,g] + bf16 cast of
    the MXU-operand weights.  Biases and the N=1 head weight stay f32 (they are
    consumed on the VPU after f32 accumulation)."""

    def perm(w):
        i, f, g, o = jnp.split(w, 4, axis=-1)
        return jnp.concatenate([i, f, o, g], axis=-1)

    return dict(
        wih_t=perm(p["wih_t"]).astype(jnp.bfloat16),  # (I, 4H) bf16
        whh_t=perm(p["whh_t"]).astype(jnp.bfloat16),  # (H, 4H) bf16
        b=perm(p["b"]),                               # (1, 4H) f32
        w1_t=p["w1_t"].astype(jnp.bfloat16),          # (H, 128) bf16
        b1=p["b1"],                                   # (1, 128) f32
        w2=p["w2"],                                   # (O, 128) f32 (VPU path)
        b2=p["b2"],                                   # (1, O)  f32
    )


def reference_forward(x, p):
    """Pure-JAX f32 reference (lax.scan LSTM + FC head), PyTorch gate order."""
    B, S, I = x.shape
    H = p["whh_t"].shape[0]

    def step(carry, x_t):
        h, c = carry
        gates = x_t @ p["wih_t"] + h @ p["whh_t"] + p["b"]
        i = jax.nn.sigmoid(gates[:, 0 * H:1 * H])
        f = jax.nn.sigmoid(gates[:, 1 * H:2 * H])
        g = jnp.tanh(gates[:, 2 * H:3 * H])
        o = jax.nn.sigmoid(gates[:, 3 * H:4 * H])
        c = f * c + i * g
        h = o * jnp.tanh(c)
        return (h, c), None

    h0 = jnp.zeros((B, H), jnp.float32)
    (h, _), _ = jax.lax.scan(step, (h0, h0), jnp.transpose(x, (1, 0, 2)))
    y1 = _leaky_relu(h @ p["w1_t"] + p["b1"])
    y2 = _leaky_relu(y1 @ p["w2"].T + p["b2"])
    return y2


if __name__ == "__main__":
    # Small shapes consistent with LSTMModel(input_size, hidden_size, 1, output_size=1).
    B, S, I, H, O = 8, 8, 128, 128, 1

    key = jax.random.PRNGKey(0)
    k_x, k_p = jax.random.split(key)
    x = jax.random.normal(k_x, (B, S, I), jnp.float32)
    params = init_params(k_p, I, H, O)
    kparams = prepare_kernel_params(params)

    out = lstm_model_forward(x, kparams["wih_t"], kparams["whh_t"], kparams["b"],
                             kparams["w1_t"], kparams["b1"],
                             kparams["w2"], kparams["b2"])
    out = jax.block_until_ready(out)

    ref = jax.block_until_ready(reference_forward(x, params))
    assert out.shape == (B, O), out.shape
    # Tolerance relaxed vs. the pure-f32 reference because the kernel now feeds
    # the MXU bf16 operands (operand rounding ~4e-3 per gate pre-activation,
    # accumulated over S=8 steps and the FC head).
    assert jnp.allclose(out, ref, atol=3e-2, rtol=3e-2), (out, ref)

    print("KERNEL_OK")
</pallas_src>

<mosaic_0001>
module attributes {stable_mosaic.version = 11 : i64} {
  func.func @lstm_fc_kernel(%arg0: memref<64x128xbf16, #tpu.memory_space<vmem>>, %arg1: memref<128x512xbf16, #tpu.memory_space<vmem>>, %arg2: memref<128x512xbf16, #tpu.memory_space<vmem>>, %arg3: memref<1x512xf32, #tpu.memory_space<vmem>>, %arg4: memref<128x128xbf16, #tpu.memory_space<vmem>>, %arg5: memref<1x128xf32, #tpu.memory_space<vmem>>, %arg6: memref<1x128xf32, #tpu.memory_space<vmem>>, %arg7: memref<1x1xf32, #tpu.memory_space<vmem>>, %arg8: memref<8x1xf32, #tpu.memory_space<vmem>>, %arg9: memref<64x512xf32, #tpu.memory_space<vmem>>) attributes {dimension_semantics = [], scalar_prefetch = 0 : i64, scratch_operands = 1 : i64, tpu.core_type = #tpu.core_type<tc>} {
    %c0 = arith.constant 0 : index
    %c0_0 = arith.constant 0 : index
    %0 = vector.load %arg0[%c0, %c0_0] : memref<64x128xbf16, #tpu.memory_space<vmem>>, vector<64x128xbf16>
    %c0_1 = arith.constant 0 : index
    %c0_2 = arith.constant 0 : index
    %1 = vector.load %arg1[%c0_1, %c0_2] : memref<128x512xbf16, #tpu.memory_space<vmem>>, vector<128x512xbf16>
    %cst = arith.constant dense<0.000000e+00> : vector<64x512xf32>
    %2 = tpu.matmul %0, %1, %cst {dimension_numbers = #tpu.dot_dimension_numbers<[1], [0], [0], [1], [0, 0, 1, 1], [], []>} : vector<64x128xbf16>, vector<128x512xbf16>, vector<64x512xf32> -> vector<64x512xf32>
    %c0_3 = arith.constant 0 : index
    %c0_4 = arith.constant 0 : index
    %3 = vector.load %arg3[%c0_3, %c0_4] : memref<1x512xf32, #tpu.memory_space<vmem>>, vector<1x512xf32>
    %4 = vector.broadcast %3 : vector<1x512xf32> to vector<64x512xf32>
    %5 = arith.addf %2, %4 : vector<64x512xf32>
    %c0_5 = arith.constant 0 : index
    %c0_6 = arith.constant 0 : index
    %6 = vector.load %arg9[%c0_5, %c0_6] : memref<64x512xf32, #tpu.memory_space<vmem>>, vector<64x512xf32>
    tpu.vector_store %arg9[%c0_5, %c0_6], %5 {strides = array<i32>} : memref<64x512xf32, #tpu.memory_space<vmem>>, vector<64x512xf32>,
    %cst_7 = arith.constant 0.000000e+00 : f32
    %7 = vector.broadcast %cst_7 : f32 to vector<8x128xf32>
    %c0_i32 = arith.constant 0 : i32
    %c8_i32 = arith.constant 8 : i32
    %8 = arith.muli %c0_i32, %c8_i32 : i32
    %9 = tpu.assume_multiple %8, 8 : i32
    %10 = arith.index_cast %9 : i32 to index
    %c0_8 = arith.constant 0 : index
    %11 = vector.load %arg9[%10, %c0_8] : memref<64x512xf32, #tpu.memory_space<vmem>>, vector<8x512xf32>
    %12 = arith.truncf %7 : vector<8x128xf32> to vector<8x128xbf16>
    %c0_9 = arith.constant 0 : index
    %c0_10 = arith.constant 0 : index
    %13 = vector.load %arg2[%c0_9, %c0_10] : memref<128x512xbf16, #tpu.memory_space<vmem>>, vector<128x512xbf16>
    %cst_11 = arith.constant dense<0.000000e+00> : vector<8x512xf32>
    %14 = tpu.matmul %12, %13, %cst_11 {dimension_numbers = #tpu.dot_dimension_numbers<[1], [0], [0], [1], [0, 0, 1, 1], [], []>} : vector<8x128xbf16>, vector<128x512xbf16>, vector<8x512xf32> -> vector<8x512xf32>
    %15 = arith.addf %11, %14 : vector<8x512xf32>
    %16 = vector.extract_strided_slice %15 {offsets = [0, 0], sizes = [8, 384], strides = [1, 1]} : vector<8x512xf32> to vector<8x384xf32>
    %cst_12 = arith.constant 5.000000e-01 : f32
    %17 = vector.broadcast %cst_12 : f32 to vector<8x384xf32>
    %18 = arith.mulf %17, %16 : vector<8x384xf32>
    %19 = math.tanh %18 : vector<8x384xf32>
    %cst_13 = arith.constant 1.000000e+00 : f32
    %20 = vector.broadcast %cst_13 : f32 to vector<8x384xf32>
    %21 = arith.addf %19, %20 : vector<8x384xf32>
    %cst_14 = arith.constant 5.000000e-01 : f32
    %22 = vector.broadcast %cst_14 : f32 to vector<8x384xf32>
    %23 = arith.mulf %22, %21 : vector<8x384xf32>
    %24 = vector.extract_strided_slice %15 {offsets = [0, 384], sizes = [8, 128], strides = [1, 1]} : vector<8x512xf32> to vector<8x128xf32>
    %25 = math.tanh %24 : vector<8x128xf32>
    %26 = vector.extract_strided_slice %23 {offsets = [0, 0], sizes = [8, 128], strides = [1, 1]} : vector<8x384xf32> to vector<8x128xf32>
    %27 = vector.extract_strided_slice %23 {offsets = [0, 128], sizes = [8, 128], strides = [1, 1]} : vector<8x384xf32> to vector<8x128xf32>
    %28 = vector.extract_strided_slice %23 {offsets = [0, 256], sizes = [8, 128], strides = [1, 1]} : vector<8x384xf32> to vector<8x128xf32>
    %29 = arith.mulf %27, %7 : vector<8x128xf32>
    %30 = arith.mulf %26, %25 : vector<8x128xf32>
    %31 = arith.addf %29, %30 : vector<8x128xf32>
    %32 = math.tanh %31 : vector<8x128xf32>
    %33 = arith.mulf %28, %32 : vector<8x128xf32>
    %c1_i32 = arith.constant 1 : i32
    %c8_i32_15 = arith.constant 8 : i32
    %34 = arith.muli %c1_i32, %c8_i32_15 : i32
    %35 = tpu.assume_multiple %34, 8 : i32
    %36 = arith.index_cast %35 : i32 to index
    %c0_16 = arith.constant 0 : index
    %37 = vector.load %arg9[%36, %c0_16] : memref<64x512xf32, #tpu.memory_space<vmem>>, vector<8x512xf32>
    %38 = arith.truncf %33 : vector<8x128xf32> to vector<8x128xbf16>
    %c0_17 = arith.constant 0 : index
    %c0_18 = arith.constant 0 : index
    %39 = vector.load %arg2[%c0_17, %c0_18] : memref<128x512xbf16, #tpu.memory_space<vmem>>, vector<128x512xbf16>
    %cst_19 = arith.constant dense<0.000000e+00> : vector<8x512xf32>
    %40 = tpu.matmul %38, %39, %cst_19 {dimension_numbers = #tpu.dot_dimension_numbers<[1], [0], [0], [1], [0, 0, 1, 1], [], []>} : vector<8x128xbf16>, vector<128x512xbf16>, vector<8x512xf32> -> vector<8x512xf32>
    %41 = arith.addf %37, %40 : vector<8x512xf32>
    %42 = vector.extract_strided_slice %41 {offsets = [0, 0], sizes = [8, 384], strides = [1, 1]} : vector<8x512xf32> to vector<8x384xf32>
    %cst_20 = arith.constant 5.000000e-01 : f32
    %43 = vector.broadcast %cst_20 : f32 to vector<8x384xf32>
    %44 = arith.mulf %43, %42 : vector<8x384xf32>
    %45 = math.tanh %44 : vector<8x384xf32>
    %cst_21 = arith.constant 1.000000e+00 : f32
    %46 = vector.broadcast %cst_21 : f32 to vector<8x384xf32>
    %47 = arith.addf %45, %46 : vector<8x384xf32>
    %cst_22 = arith.constant 5.000000e-01 : f32
    %48 = vector.broadcast %cst_22 : f32 to vector<8x384xf32>
    %49 = arith.mulf %48, %47 : vector<8x384xf32>
    %50 = vector.extract_strided_slice %41 {offsets = [0, 384], sizes = [8, 128], strides = [1, 1]} : vector<8x512xf32> to vector<8x128xf32>
    %51 = math.tanh %50 : vector<8x128xf32>
    %52 = vector.extract_strided_slice %49 {offsets = [0, 0], sizes = [8, 128], strides = [1, 1]} : vector<8x384xf32> to vector<8x128xf32>
    %53 = vector.extract_strided_slice %49 {offsets = [0, 128], sizes = [8, 128], strides = [1, 1]} : vector<8x384xf32> to vector<8x128xf32>
    %54 = vector.extract_strided_slice %49 {offsets = [0, 256], sizes = [8, 128], strides = [1, 1]} : vector<8x384xf32> to vector<8x128xf32>
    %55 = arith.mulf %53, %31 : vector<8x128xf32>
    %56 = arith.mulf %52, %51 : vector<8x128xf32>
    %57 = arith.addf %55, %56 : vector<8x128xf32>
    %58 = math.tanh %57 : vector<8x128xf32>
    %59 = arith.mulf %54, %58 : vector<8x128xf32>
    %c2_i32 = arith.constant 2 : i32
    %c8_i32_23 = arith.constant 8 : i32
    %60 = arith.muli %c2_i32, %c8_i32_23 : i32
    %61 = tpu.assume_multiple %60, 8 : i32
    %62 = arith.index_cast %61 : i32 to index
    %c0_24 = arith.constant 0 : index
    %63 = vector.load %arg9[%62, %c0_24] : memref<64x512xf32, #tpu.memory_space<vmem>>, vector<8x512xf32>
    %64 = arith.truncf %59 : vector<8x128xf32> to vector<8x128xbf16>
    %c0_25 = arith.constant 0 : index
    %c0_26 = arith.constant 0 : index
    %65 = vector.load %arg2[%c0_25, %c0_26] : memref<128x512xbf16, #tpu.memory_space<vmem>>, vector<128x512xbf16>
    %cst_27 = arith.constant dense<0.000000e+00> : vector<8x512xf32>
    %66 = tpu.matmul %64, %65, %cst_27 {dimension_numbers = #tpu.dot_dimension_numbers<[1], [0], [0], [1], [0, 0, 1, 1], [], []>} : vector<8x128xbf16>, vector<128x512xbf16>, vector<8x512xf32> -> vector<8x512xf32>
    %67 = arith.addf %63, %66 : vector<8x512xf32>
    %68 = vector.extract_strided_slice %67 {offsets = [0, 0], sizes = [8, 384], strides = [1, 1]} : vector<8x512xf32> to vector<8x384xf32>
    %cst_28 = arith.constant 5.000000e-01 : f32
    %69 = vector.broadcast %cst_28 : f32 to vector<8x384xf32>
    %70 = arith.mulf %69, %68 : vector<8x384xf32>
    %71 = math.tanh %70 : vector<8x384xf32>
    %cst_29 = arith.constant 1.000000e+00 : f32
    %72 = vector.broadcast %cst_29 : f32 to vector<8x384xf32>
    %73 = arith.addf %71, %72 : vector<8x384xf32>
    %cst_30 = arith.constant 5.000000e-01 : f32
    %74 = vector.broadcast %cst_30 : f32 to vector<8x384xf32>
    %75 = arith.mulf %74, %73 : vector<8x384xf32>
    %76 = vector.extract_strided_slice %67 {offsets = [0, 384], sizes = [8, 128], strides = [1, 1]} : vector<8x512xf32> to vector<8x128xf32>
    %77 = math.tanh %76 : vector<8x128xf32>
    %78 = vector.extract_strided_slice %75 {offsets = [0, 0], sizes = [8, 128], strides = [1, 1]} : vector<8x384xf32> to vector<8x128xf32>
    %79 = vector.extract_strided_slice %75 {offsets = [0, 128], sizes = [8, 128], strides = [1, 1]} : vector<8x384xf32> to vector<8x128xf32>
    %80 = vector.extract_strided_slice %75 {offsets = [0, 256], sizes = [8, 128], strides = [1, 1]} : vector<8x384xf32> to vector<8x128xf32>
    %81 = arith.mulf %79, %57 : vector<8x128xf32>
    %82 = arith.mulf %78, %77 : vector<8x128xf32>
    %83 = arith.addf %81, %82 : vector<8x128xf32>
    %84 = math.tanh %83 : vector<8x128xf32>
    %85 = arith.mulf %80, %84 : vector<8x128xf32>
    %c3_i32 = arith.constant 3 : i32
    %c8_i32_31 = arith.constant 8 : i32
    %86 = arith.muli %c3_i32, %c8_i32_31 : i32
    %87 = tpu.assume_multiple %86, 8 : i32
    %88 = arith.index_cast %87 : i32 to index
    %c0_32 = arith.constant 0 : index
    %89 = vector.load %arg9[%88, %c0_32] : memref<64x512xf32, #tpu.memory_space<vmem>>, vector<8x512xf32>
    %90 = arith.truncf %85 : vector<8x128xf32> to vector<8x128xbf16>
    %c0_33 = arith.constant 0 : index
    %c0_34 = arith.constant 0 : index
    %91 = vector.load %arg2[%c0_33, %c0_34] : memref<128x512xbf16, #tpu.memory_space<vmem>>, vector<128x512xbf16>
    %cst_35 = arith.constant dense<0.000000e+00> : vector<8x512xf32>
    %92 = tpu.matmul %90, %91, %cst_35 {dimension_numbers = #tpu.dot_dimension_numbers<[1], [0], [0], [1], [0, 0, 1, 1], [], []>} : vector<8x128xbf16>, vector<128x512xbf16>, vector<8x512xf32> -> vector<8x512xf32>
    %93 = arith.addf %89, %92 : vector<8x512xf32>
    %94 = vector.extract_strided_slice %93 {offsets = [0, 0], sizes = [8, 384], strides = [1, 1]} : vector<8x512xf32> to vector<8x384xf32>
    %cst_36 = arith.constant 5.000000e-01 : f32
    %95 = vector.broadcast %cst_36 : f32 to vector<8x384xf32>
    %96 = arith.mulf %95, %94 : vector<8x384xf32>
    %97 = math.tanh %96 : vector<8x384xf32>
    %cst_37 = arith.constant 1.000000e+00 : f32
    %98 = vector.broadcast %cst_37 : f32 to vector<8x384xf32>
    %99 = arith.addf %97, %98 : vector<8x384xf32>
    %cst_38 = arith.constant 5.000000e-01 : f32
    %100 = vector.broadcast %cst_38 : f32 to vector<8x384xf32>
    %101 = arith.mulf %100, %99 : vector<8x384xf32>
    %102 = vector.extract_strided_slice %93 {offsets = [0, 384], sizes = [8, 128], strides = [1, 1]} : vector<8x512xf32> to vector<8x128xf32>
    %103 = math.tanh %102 : vector<8x128xf32>
    %104 = vector.extract_strided_slice %101 {offsets = [0, 0], sizes = [8, 128], strides = [1, 1]} : vector<8x384xf32> to vector<8x128xf32>
    %105 = vector.extract_strided_slice %101 {offsets = [0, 128], sizes = [8, 128], strides = [1, 1]} : vector<8x384xf32> to vector<8x128xf32>
    %106 = vector.extract_strided_slice %101 {offsets = [0, 256], sizes = [8, 128], strides = [1, 1]} : vector<8x384xf32> to vector<8x128xf32>
    %107 = arith.mulf %105, %83 : vector<8x128xf32>
    %108 = arith.mulf %104, %103 : vector<8x128xf32>
    %109 = arith.addf %107, %108 : vector<8x128xf32>
    %110 = math.tanh %109 : vector<8x128xf32>
    %111 = arith.mulf %106, %110 : vector<8x128xf32>
    %c4_i32 = arith.constant 4 : i32
    %c8_i32_39 = arith.constant 8 : i32
    %112 = arith.muli %c4_i32, %c8_i32_39 : i32
    %113 = tpu.assume_multiple %112, 8 : i32
    %114 = arith.index_cast %113 : i32 to index
    %c0_40 = arith.constant 0 : index
    %115 = vector.load %arg9[%114, %c0_40] : memref<64x512xf32, #tpu.memory_space<vmem>>, vector<8x512xf32>
    %116 = arith.truncf %111 : vector<8x128xf32> to vector<8x128xbf16>
    %c0_41 = arith.constant 0 : index
    %c0_42 = arith.constant 0 : index
    %117 = vector.load %arg2[%c0_41, %c0_42] : memref<128x512xbf16, #tpu.memory_space<vmem>>, vector<128x512xbf16>
    %cst_43 = arith.constant dense<0.000000e+00> : vector<8x512xf32>
    %118 = tpu.matmul %116, %117, %cst_43 {dimension_numbers = #tpu.dot_dimension_numbers<[1], [0], [0], [1], [0, 0, 1, 1], [], []>} : vector<8x128xbf16>, vector<128x512xbf16>, vector<8x512xf32> -> vector<8x512xf32>
    %119 = arith.addf %115, %118 : vector<8x512xf32>
    %120 = vector.extract_strided_slice %119 {offsets = [0, 0], sizes = [8, 384], strides = [1, 1]} : vector<8x512xf32> to vector<8x384xf32>
    %cst_44 = arith.constant 5.000000e-01 : f32
    %121 = vector.broadcast %cst_44 : f32 to vector<8x384xf32>
    %122 = arith.mulf %121, %120 : vector<8x384xf32>
    %123 = math.tanh %122 : vector<8x384xf32>
    %cst_45 = arith.constant 1.000000e+00 : f32
    %124 = vector.broadcast %cst_45 : f32 to vector<8x384xf32>
    %125 = arith.addf %123, %124 : vector<8x384xf32>
    %cst_46 = arith.constant 5.000000e-01 : f32
    %126 = vector.broadcast %cst_46 : f32 to vector<8x384xf32>
    %127 = arith.mulf %126, %125 : vector<8x384xf32>
    %128 = vector.extract_strided_slice %119 {offsets = [0, 384], sizes = [8, 128], strides = [1, 1]} : vector<8x512xf32> to vector<8x128xf32>
    %129 = math.tanh %128 : vector<8x128xf32>
    %130 = vector.extract_strided_slice %127 {offsets = [0, 0], sizes = [8, 128], strides = [1, 1]} : vector<8x384xf32> to vector<8x128xf32>
    %131 = vector.extract_strided_slice %127 {offsets = [0, 128], sizes = [8, 128], strides = [1, 1]} : vector<8x384xf32> to vector<8x128xf32>
    %132 = vector.extract_strided_slice %127 {offsets = [0, 256], sizes = [8, 128], strides = [1, 1]} : vector<8x384xf32> to vector<8x128xf32>
    %133 = arith.mulf %131, %109 : vector<8x128xf32>
    %134 = arith.mulf %130, %129 : vector<8x128xf32>
    %135 = arith.addf %133, %134 : vector<8x128xf32>
    %136 = math.tanh %135 : vector<8x128xf32>
    %137 = arith.mulf %132, %136 : vector<8x128xf32>
    %c5_i32 = arith.constant 5 : i32
    %c8_i32_47 = arith.constant 8 : i32
    %138 = arith.muli %c5_i32, %c8_i32_47 : i32
    %139 = tpu.assume_multiple %138, 8 : i32
    %140 = arith.index_cast %139 : i32 to index
    %c0_48 = arith.constant 0 : index
    %141 = vector.load %arg9[%140, %c0_48] : memref<64x512xf32, #tpu.memory_space<vmem>>, vector<8x512xf32>
    %142 = arith.truncf %137 : vector<8x128xf32> to vector<8x128xbf16>
    %c0_49 = arith.constant 0 : index
    %c0_50 = arith.constant 0 : index
    %143 = vector.load %arg2[%c0_49, %c0_50] : memref<128x512xbf16, #tpu.memory_space<vmem>>, vector<128x512xbf16>
    %cst_51 = arith.constant dense<0.000000e+00> : vector<8x512xf32>
    %144 = tpu.matmul %142, %143, %cst_51 {dimension_numbers = #tpu.dot_dimension_numbers<[1], [0], [0], [1], [0, 0, 1, 1], [], []>} : vector<8x128xbf16>, vector<128x512xbf16>, vector<8x512xf32> -> vector<8x512xf32>
    %145 = arith.addf %141, %144 : vector<8x512xf32>
    %146 = vector.extract_strided_slice %145 {offsets = [0, 0], sizes = [8, 384], strides = [1, 1]} : vector<8x512xf32> to vector<8x384xf32>
    %cst_52 = arith.constant 5.000000e-01 : f32
    %147 = vector.broadcast %cst_52 : f32 to vector<8x384xf32>
    %148 = arith.mulf %147, %146 : vector<8x384xf32>
    %149 = math.tanh %148 : vector<8x384xf32>
    %cst_53 = arith.constant 1.000000e+00 : f32
    %150 = vector.broadcast %cst_53 : f32 to vector<8x384xf32>
    %151 = arith.addf %149, %150 : vector<8x384xf32>
    %cst_54 = arith.constant 5.000000e-01 : f32
    %152 = vector.broadcast %cst_54 : f32 to vector<8x384xf32>
    %153 = arith.mulf %152, %151 : vector<8x384xf32>
    %154 = vector.extract_strided_slice %145 {offsets = [0, 384], sizes = [8, 128], strides = [1, 1]} : vector<8x512xf32> to vector<8x128xf32>
    %155 = math.tanh %154 : vector<8x128xf32>
    %156 = vector.extract_strided_slice %153 {offsets = [0, 0], sizes = [8, 128], strides = [1, 1]} : vector<8x384xf32> to vector<8x128xf32>
    %157 = vector.extract_strided_slice %153 {offsets = [0, 128], sizes = [8, 128], strides = [1, 1]} : vector<8x384xf32> to vector<8x128xf32>
    %158 = vector.extract_strided_slice %153 {offsets = [0, 256], sizes = [8, 128], strides = [1, 1]} : vector<8x384xf32> to vector<8x128xf32>
    %159 = arith.mulf %157, %135 : vector<8x128xf32>
    %160 = arith.mulf %156, %155 : vector<8x128xf32>
    %161 = arith.addf %159, %160 : vector<8x128xf32>
    %162 = math.tanh %161 : vector<8x128xf32>
    %163 = arith.mulf %158, %162 : vector<8x128xf32>
    %c6_i32 = arith.constant 6 : i32
    %c8_i32_55 = arith.constant 8 : i32
    %164 = arith.muli %c6_i32, %c8_i32_55 : i32
    %165 = tpu.assume_multiple %164, 8 : i32
    %166 = arith.index_cast %165 : i32 to index
    %c0_56 = arith.constant 0 : index
    %167 = vector.load %arg9[%166, %c0_56] : memref<64x512xf32, #tpu.memory_space<vmem>>, vector<8x512xf32>
    %168 = arith.truncf %163 : vector<8x128xf32> to vector<8x128xbf16>
    %c0_57 = arith.constant 0 : index
    %c0_58 = arith.constant 0 : index
    %169 = vector.load %arg2[%c0_57, %c0_58] : memref<128x512xbf16, #tpu.memory_space<vmem>>, vector<128x512xbf16>
    %cst_59 = arith.constant dense<0.000000e+00> : vector<8x512xf32>
    %170 = tpu.matmul %168, %169, %cst_59 {dimension_numbers = #tpu.dot_dimension_numbers<[1], [0], [0], [1], [0, 0, 1, 1], [], []>} : vector<8x128xbf16>, vector<128x512xbf16>, vector<8x512xf32> -> vector<8x512xf32>
    %171 = arith.addf %167, %170 : vector<8x512xf32>
    %172 = vector.extract_strided_slice %171 {offsets = [0, 0], sizes = [8, 384], strides = [1, 1]} : vector<8x512xf32> to vector<8x384xf32>
    %cst_60 = arith.constant 5.000000e-01 : f32
    %173 = vector.broadcast %cst_60 : f32 to vector<8x384xf32>
    %174 = arith.mulf %173, %172 : vector<8x384xf32>
    %175 = math.tanh %174 : vector<8x384xf32>
    %cst_61 = arith.constant 1.000000e+00 : f32
    %176 = vector.broadcast %cst_61 : f32 to vector<8x384xf32>
    %177 = arith.addf %175, %176 : vector<8x384xf32>
    %cst_62 = arith.constant 5.000000e-01 : f32
    %178 = vector.broadcast %cst_62 : f32 to vector<8x384xf32>
    %179 = arith.mulf %178, %177 : vector<8x384xf32>
    %180 = vector.extract_strided_slice %171 {offsets = [0, 384], sizes = [8, 128], strides = [1, 1]} : vector<8x512xf32> to vector<8x128xf32>
    %181 = math.tanh %180 : vector<8x128xf32>
    %182 = vector.extract_strided_slice %179 {offsets = [0, 0], sizes = [8, 128], strides = [1, 1]} : vector<8x384xf32> to vector<8x128xf32>
    %183 = vector.extract_strided_slice %179 {offsets = [0, 128], sizes = [8, 128], strides = [1, 1]} : vector<8x384xf32> to vector<8x128xf32>
    %184 = vector.extract_strided_slice %179 {offsets = [0, 256], sizes = [8, 128], strides = [1, 1]} : vector<8x384xf32> to vector<8x128xf32>
    %185 = arith.mulf %183, %161 : vector<8x128xf32>
    %186 = arith.mulf %182, %181 : vector<8x128xf32>
    %187 = arith.addf %185, %186 : vector<8x128xf32>
    %188 = math.tanh %187 : vector<8x128xf32>
    %189 = arith.mulf %184, %188 : vector<8x128xf32>
    %c7_i32 = arith.constant 7 : i32
    %c8_i32_63 = arith.constant 8 : i32
    %190 = arith.muli %c7_i32, %c8_i32_63 : i32
    %191 = tpu.assume_multiple %190, 8 : i32
    %192 = arith.index_cast %191 : i32 to index
    %c0_64 = arith.constant 0 : index
    %193 = vector.load %arg9[%192, %c0_64] : memref<64x512xf32, #tpu.memory_space<vmem>>, vector<8x512xf32>
    %194 = arith.truncf %189 : vector<8x128xf32> to vector<8x128xbf16>
    %c0_65 = arith.constant 0 : index
    %c0_66 = arith.constant 0 : index
    %195 = vector.load %arg2[%c0_65, %c0_66] : memref<128x512xbf16, #tpu.memory_space<vmem>>, vector<128x512xbf16>
    %cst_67 = arith.constant dense<0.000000e+00> : vector<8x512xf32>
    %196 = tpu.matmul %194, %195, %cst_67 {dimension_numbers = #tpu.dot_dimension_numbers<[1], [0], [0], [1], [0, 0, 1, 1], [], []>} : vector<8x128xbf16>, vector<128x512xbf16>, vector<8x512xf32> -> vector<8x512xf32>
    %197 = arith.addf %193, %196 : vector<8x512xf32>
    %198 = vector.extract_strided_slice %197 {offsets = [0, 0], sizes = [8, 384], strides = [1, 1]} : vector<8x512xf32> to vector<8x384xf32>
    %cst_68 = arith.constant 5.000000e-01 : f32
    %199 = vector.broadcast %cst_68 : f32 to vector<8x384xf32>
    %200 = arith.mulf %199, %198 : vector<8x384xf32>
    %201 = math.tanh %200 : vector<8x384xf32>
    %cst_69 = arith.constant 1.000000e+00 : f32
    %202 = vector.broadcast %cst_69 : f32 to vector<8x384xf32>
    %203 = arith.addf %201, %202 : vector<8x384xf32>
    %cst_70 = arith.constant 5.000000e-01 : f32
    %204 = vector.broadcast %cst_70 : f32 to vector<8x384xf32>
    %205 = arith.mulf %204, %203 : vector<8x384xf32>
    %206 = vector.extract_strided_slice %197 {offsets = [0, 384], sizes = [8, 128], strides = [1, 1]} : vector<8x512xf32> to vector<8x128xf32>
    %207 = math.tanh %206 : vector<8x128xf32>
    %208 = vector.extract_strided_slice %205 {offsets = [0, 0], sizes = [8, 128], strides = [1, 1]} : vector<8x384xf32> to vector<8x128xf32>
    %209 = vector.extract_strided_slice %205 {offsets = [0, 128], sizes = [8, 128], strides = [1, 1]} : vector<8x384xf32> to vector<8x128xf32>
    %210 = vector.extract_strided_slice %205 {offsets = [0, 256], sizes = [8, 128], strides = [1, 1]} : vector<8x384xf32> to vector<8x128xf32>
    %211 = arith.mulf %209, %187 : vector<8x128xf32>
    %212 = arith.mulf %208, %207 : vector<8x128xf32>
    %213 = arith.addf %211, %212 : vector<8x128xf32>
    %214 = math.tanh %213 : vector<8x128xf32>
    %215 = arith.mulf %210, %214 : vector<8x128xf32>
    %c8_i32_71 = arith.constant 8 : i32
    %216 = arith.truncf %215 : vector<8x128xf32> to vector<8x128xbf16>
    %c0_72 = arith.constant 0 : index
    %c0_73 = arith.constant 0 : index
    %217 = vector.load %arg4[%c0_72, %c0_73] : memref<128x128xbf16, #tpu.memory_space<vmem>>, vector<128x128xbf16>
    %cst_74 = arith.constant dense<0.000000e+00> : vector<8x128xf32>
    %218 = tpu.matmul %216, %217, %cst_74 {dimension_numbers = #tpu.dot_dimension_numbers<[1], [0], [0], [1], [0, 0, 1, 1], [], []>} : vector<8x128xbf16>, vector<128x128xbf16>, vector<8x128xf32> -> vector<8x128xf32>
    %c0_75 = arith.constant 0 : index
    %c0_76 = arith.constant 0 : index
    %219 = vector.load %arg5[%c0_75, %c0_76] : memref<1x128xf32, #tpu.memory_space<vmem>>, vector<1x128xf32>
    %220 = vector.broadcast %219 : vector<1x128xf32> to vector<8x128xf32>
    %221 = arith.addf %218, %220 : vector<8x128xf32>
    %cst_77 = arith.constant 0.000000e+00 : f32
    %222 = vector.broadcast %cst_77 : f32 to vector<8x128xf32>
    %223 = arith.cmpf oge, %221, %222 : vector<8x128xf32>
    %cst_78 = arith.constant 0.00999999977 : f32
    %224 = vector.broadcast %cst_78 : f32 to vector<8x128xf32>
    %225 = arith.mulf %224, %221 : vector<8x128xf32>
    %226 = arith.select %223, %221, %225 : vector<8x128xi1>, vector<8x128xf32>
    %c0_79 = arith.constant 0 : index
    %c0_80 = arith.constant 0 : index
    %227 = vector.load %arg6[%c0_79, %c0_80] : memref<1x128xf32, #tpu.memory_space<vmem>>, vector<1x128xf32>
    %228 = vector.broadcast %227 : vector<1x128xf32> to vector<8x128xf32>
    %229 = arith.mulf %226, %228 : vector<8x128xf32>
    %cst_81 = arith.constant dense<0.000000e+00> : vector<8xf32>
    %230 = vector.multi_reduction <add>, %229, %cst_81 [1] : vector<8x128xf32> to vector<8xf32>
    %231 = vector.shape_cast %230 : vector<8xf32> to vector<8x1xf32>
    %c0_82 = arith.constant 0 : index
    %c0_83 = arith.constant 0 : index
    %232 = vector.load %arg7[%c0_82, %c0_83] : memref<1x1xf32, #tpu.memory_space<vmem>>, vector<1x1xf32>
    %233 = vector.broadcast %232 : vector<1x1xf32> to vector<8x1xf32>
    %234 = arith.addf %231, %233 : vector<8x1xf32>
    %cst_84 = arith.constant 0.000000e+00 : f32
    %235 = vector.broadcast %cst_84 : f32 to vector<8x1xf32>
    %236 = arith.cmpf oge, %234, %235 : vector<8x1xf32>
    %cst_85 = arith.constant 0.00999999977 : f32
    %237 = vector.broadcast %cst_85 : f32 to vector<8x1xf32>
    %238 = arith.mulf %237, %234 : vector<8x1xf32>
    %239 = arith.select %236, %234, %238 : vector<8x1xi1>, vector<8x1xf32>
    %c0_86 = arith.constant 0 : index
    %c0_87 = arith.constant 0 : index
    %240 = vector.load %arg8[%c0_86, %c0_87] : memref<8x1xf32, #tpu.memory_space<vmem>>, vector<8x1xf32>
    tpu.vector_store %arg8[%c0_86, %c0_87], %239 {strides = array<i32>} : memref<8x1xf32, #tpu.memory_space<vmem>>, vector<8x1xf32>,
    return
  }
}

</mosaic_0001>

<llo_original>
// kernel: lstm_model_forward.1
$region0: #{lstm_model_forward.1}
  #allocation0 [shape = 'u32[]', space=smem, size = 0x4, offset = 0x4, fixed_abs, tag = 'smem constant byte address 0x4 - core index']
  #allocation1 [shape = 'u32[144,128]{1,0:T(1,128)}', space=vmem, size = 0x12000, scoped, tag = 'internal scratch']
  #allocation2 [shape = 'f32[64,512]{1,0:T(8,128)}', space=vmem, size = 0x20000, scoped, tag = 'scratch operand']
  #allocation3 [shape = 'f32[1,1]{1,0:T(1,128)S(1)}', space=vmem, size = 0x200, scoped, tag = 'scoped memory for lstm_model_forward.1']
  %s0 = inlined_call_operand.vmem [shape: bf16[64,128], index: 0, kind: input, shape index: {}]
  %s1 = inlined_call_operand.hbm [shape: bf16[128,512], index: 1, kind: input, shape index: {}]
  %s2 = inlined_call_operand.hbm [shape: bf16[128,512], index: 2, kind: input, shape index: {}]
  %s3 = inlined_call_operand.vmem [shape: f32[1,512], index: 3, kind: input, shape index: {}]
  %s4 = inlined_call_operand.vmem [shape: bf16[128,128], index: 4, kind: input, shape index: {}]
  %s5 = inlined_call_operand.vmem [shape: f32[1,128], index: 5, kind: input, shape index: {}]
  %s6 = inlined_call_operand.vmem [shape: f32[1,128], index: 6, kind: input, shape index: {}]
  %s7 = inlined_call_operand.<no memory space> [shape: f32[1,1], index: 7, kind: input, shape index: {}]
  %s8 = inlined_call_operand.vmem [shape: f32[8,1], index: 8, kind: output, shape index: {}]
  %s9 = sld [smem:[#allocation0]]
  $region50: #{lstm_model_forward.1} parent=0
    _
  %s11 = ssub.s32 1, %s9
  %s12 = scalar_select 0, %s11, %s9
  %v13 = vstv %s7
  %14 = vst [vmem:[#allocation3] sm:$0x1] %v13
  $region1: #{lstm_model_forward.1} parent=0
    #allocation4 [shape = 'u8[131072]{0}', space=vmem, size = 0x20000, scoped, tag = 'input window, operand 1, single buffered']
    #allocation5 [shape = 's32[1]{0}', space=sflag, size = 0x4, scoped, tag = 'scoped memory for lstm_model_forward.1']
    #allocation6 [shape = 'u8[131072]{0}', space=vmem, size = 0x20000, scoped, tag = 'input window, operand 2, single buffered']
    #allocation7 [shape = 's32[1]{0}', space=sflag, size = 0x4, scoped, tag = 'scoped memory for lstm_model_forward.1']
    %15 = vsyncpa [#allocation5], 0
    %16 = vsyncpa [#allocation7], 0
    // Predicated region
    $region2: #{lstm_model_forward.1} parent=1 // pred_check
      _
    $region3: #{lstm_model_forward.1} parent=1 // pred_check_branch
      %18 = sbr.rel (0) target = $region5
    $region4: #{lstm_model_forward.1} parent=1 // pred_region
      _
    $region5: #{lstm_model_forward.1} parent=1 // pred_fallthru
      _
    // Predicated region
    $region6: #{lstm_model_forward.1} parent=1 // pred_check
      _
    $region7: #{lstm_model_forward.1} parent=1 // pred_check_branch
      %20 = sbr.rel (0) target = $region9
    $region8: #{lstm_model_forward.1} parent=1 // pred_region
      %s22 = ssub.s32 4096, 4096
      %23 = vsyncadd [#allocation5], %s22
      %s24 = sshll.u32 [#allocation4], 4
      %s25 = int_to_ptr.vmem [resolvable:$true] %s24
      %30 = dma.hbm_to_vmem [thread:$0]  %s1, 4096, %s25, [#allocation5], 256, 256, 16
    $region9: #{lstm_model_forward.1} parent=1 // pred_fallthru
      _
    // Predicated region
    $region10: #{lstm_model_forward.1} parent=1 // pred_check
      _
    $region11: #{lstm_model_forward.1} parent=1 // pred_check_branch
      %32 = sbr.rel (0) target = $region13
    $region12: #{lstm_model_forward.1} parent=1 // pred_region
      %s34 = ssub.s32 4096, 4096
      %35 = vsyncadd [#allocation7], %s34
      %s36 = sshll.u32 [#allocation6], 4
      %s37 = int_to_ptr.vmem [resolvable:$true] %s36
      %42 = dma.hbm_to_vmem [thread:$0]  %s2, 4096, %s37, [#allocation7], 256, 256, 16
    $region13: #{lstm_model_forward.1} parent=1 // pred_fallthru
      _
    // Predicated region
    $region14: #{lstm_model_forward.1} parent=1 // pred_check
      _
    $region15: #{lstm_model_forward.1} parent=1 // pred_check_branch
      %44 = sbr.rel (0) target = $region17
    $region16: #{lstm_model_forward.1} parent=1 // pred_region
      _
    $region17: #{lstm_model_forward.1} parent=1 // pred_fallthru
      _
    // Predicated region
    $region18: #{lstm_model_forward.1} parent=1 // pred_check
      _
    $region19: #{lstm_model_forward.1} parent=1 // pred_check_branch
      %46 = sbr.rel (0) target = $region21
    $region20: #{lstm_model_forward.1} parent=1 // pred_region
      _
    $region21: #{lstm_model_forward.1} parent=1 // pred_fallthru
      _
    // Predicated region
    $region22: #{lstm_model_forward.1} parent=1 // pred_check
      _
    $region23: #{lstm_model_forward.1} parent=1 // pred_check_branch
      %48 = sbr.rel (0) target = $region25
    $region24: #{lstm_model_forward.1} parent=1 // pred_region
      _
    $region25: #{lstm_model_forward.1} parent=1 // pred_fallthru
      _
    // Predicated region
    $region26: #{lstm_model_forward.1} parent=1 // pred_check
      _
    $region27: #{lstm_model_forward.1} parent=1 // pred_check_branch
      %50 = sbr.rel (0) target = $region29
    $region28: #{lstm_model_forward.1} parent=1 // pred_region
      _
    $region29: #{lstm_model_forward.1} parent=1 // pred_fallthru
      _
    // Predicated region
    $region30: #{lstm_model_forward.1} parent=1 // pred_check
      _
    $region31: #{lstm_model_forward.1} parent=1 // pred_check_branch
      %52 = sbr.rel (0) target = $region33
    $region32: #{lstm_model_forward.1} parent=1 // pred_region
      _
    $region33: #{lstm_model_forward.1} parent=1 // pred_fallthru
      _
    // Predicated region
    $region34: #{lstm_model_forward.1} parent=1 // pred_check
      _
    $region35: #{lstm_model_forward.1} parent=1 // pred_check_branch
      %54 = sbr.rel (0) target = $region37
    $region36: #{lstm_model_forward.1} parent=1 // pred_region
      %55 = dma.done [#allocation5], 4096
    $region37: #{lstm_model_forward.1} parent=1 // pred_fallthru
      _
    // Predicated region
    $region38: #{lstm_model_forward.1} parent=1 // pred_check
      _
    $region39: #{lstm_model_forward.1} parent=1 // pred_check_branch
      %57 = sbr.rel (0) target = $region41
    $region40: #{lstm_model_forward.1} parent=1 // pred_region
      %58 = dma.done [#allocation7], 4096
    $region41: #{lstm_model_forward.1} parent=1 // pred_fallthru
      _
    %v60 = vld [vmem:[%s0] sm:$0xf]
    %v61 = vld [vmem:[%s0 + $0x4] sm:$0xf]
    %v62 = vld [vmem:[%s0 + $0x8] sm:$0xf]
    %v63 = vld [vmem:[%s0 + $0xc] sm:$0xf]
    %v64 = vld [vmem:[%s0 + $0x10] sm:$0xf]
    %v65 = vld [vmem:[%s0 + $0x14] sm:$0xf]
    %v66 = vld [vmem:[%s0 + $0x18] sm:$0xf]
    %v67 = vld [vmem:[%s0 + $0x1c] sm:$0xf]
    %v68 = vld [vmem:[#allocation4] sm:$0xff]
    %v69 = vld [vmem:[#allocation4 + $0x8] sm:$0xff]
    %v70 = vld [vmem:[#allocation4 + $0x10] sm:$0xff]
    %v71 = vld [vmem:[#allocation4 + $0x18] sm:$0xff]
    %v72 = vld [vmem:[#allocation4 + $0x20] sm:$0xff]
    %v73 = vld [vmem:[#allocation4 + $0x28] sm:$0xff]
    %v74 = vld [vmem:[#allocation4 + $0x30] sm:$0xff]
    %v75 = vld [vmem:[#allocation4 + $0x38] sm:$0xff]
    %v76 = vld [vmem:[#allocation4 + $0x40] sm:$0xff]
    %v77 = vld [vmem:[#allocation4 + $0x48] sm:$0xff]
    %v78 = vld [vmem:[#allocation4 + $0x50] sm:$0xff]
    %v79 = vld [vmem:[#allocation4 + $0x58] sm:$0xff]
    %v80 = vld [vmem:[#allocation4 + $0x60] sm:$0xff]
    %v81 = vld [vmem:[#allocation4 + $0x68] sm:$0xff]
    %v82 = vld [vmem:[#allocation4 + $0x70] sm:$0xff]
    %v83 = vld [vmem:[#allocation4 + $0x78] sm:$0xff]
    %v84 = vld [vmem:[#allocation4 + $0x80] sm:$0xff]
    %v85 = vld [vmem:[#allocation4 + $0x88] sm:$0xff]
    %v86 = vld [vmem:[#allocation4 + $0x90] sm:$0xff]
    %v87 = vld [vmem:[#allocation4 + $0x98] sm:$0xff]
    %v88 = vld [vmem:[#allocation4 + $0xa0] sm:$0xff]
    %v89 = vld [vmem:[#allocation4 + $0xa8] sm:$0xff]
    %v90 = vld [vmem:[#allocation4 + $0xb0] sm:$0xff]
    %v91 = vld [vmem:[#allocation4 + $0xb8] sm:$0xff]
    %v92 = vld [vmem:[#allocation4 + $0xc0] sm:$0xff]
    %v93 = vld [vmem:[#allocation4 + $0xc8] sm:$0xff]
    %v94 = vld [vmem:[#allocation4 + $0xd0] sm:$0xff]
    %v95 = vld [vmem:[#allocation4 + $0xd8] sm:$0xff]
    %v96 = vld [vmem:[#allocation4 + $0xe0] sm:$0xff]
    %v97 = vld [vmem:[#allocation4 + $0xe8] sm:$0xff]
    %v98 = vld [vmem:[#allocation4 + $0xf0] sm:$0xff]
    %v99 = vld [vmem:[#allocation4 + $0xf8] sm:$0xff]
    %v100 = vld [vmem:[%s3] sm:$0xf]
    %v102 = vlaneseq
    %v103 = vshrl.u32 %v102, 7
    %v104 = vsub.s32 0, %v103
    %v105 = vrot.slane %v100, %v104
    %v106 = vlaneseq
    %v107 = vshrl.u32 %v106, 7
    %v108 = vsub.s32 1, %v107
    %v109 = vrot.slane %v100, %v108
    %v110 = vlaneseq
    %v111 = vshrl.u32 %v110, 7
    %v112 = vsub.s32 2, %v111
    %v113 = vrot.slane %v100, %v112
    %v114 = vlaneseq
    %v115 = vshrl.u32 %v114, 7
    %v116 = vsub.s32 3, %v115
    %v117 = vrot.slane %v100, %v116
    %v130 = vunpack.c.l.b16 %v60
    %v131 = vunpack.c.l.b16 %v61
    %v132 = vunpack.c.l.b16 %v62
    %v133 = vunpack.c.l.b16 %v63
    %v134 = vunpack.c.l.b16 %v64
    %v135 = vunpack.c.l.b16 %v65
    %v136 = vunpack.c.l.b16 %v66
    %v137 = vunpack.c.l.b16 %v67
    %v138 = vpack.c.b16 %v131, %v130
    %v139 = vpack.c.b16 %v133, %v132
    %v140 = vpack.c.b16 %v135, %v134
    %v141 = vpack.c.b16 %v137, %v136
    %v178 = vunpack.c.l.b16 %v68
    %v179 = vunpack.c.h.b16 %v68
    %v180 = vunpack.c.l.b16 %v69
    %v181 = vunpack.c.h.b16 %v69
    %v182 = vunpack.c.l.b16 %v70
    %v183 = vunpack.c.h.b16 %v70
    %v184 = vunpack.c.l.b16 %v71
    %v185 = vunpack.c.h.b16 %v71
    %v186 = vunpack.c.l.b16 %v72
    %v187 = vunpack.c.h.b16 %v72
    %v188 = vunpack.c.l.b16 %v73
    %v189 = vunpack.c.h.b16 %v73
    %v190 = vunpack.c.l.b16 %v74
    %v191 = vunpack.c.h.b16 %v74
    %v192 = vunpack.c.l.b16 %v75
    %v193 = vunpack.c.h.b16 %v75
    %v194 = vunpack.c.l.b16 %v76
    %v195 = vunpack.c.h.b16 %v76
    %v196 = vunpack.c.l.b16 %v77
    %v197 = vunpack.c.h.b16 %v77
    %v198 = vunpack.c.l.b16 %v78
    %v199 = vunpack.c.h.b16 %v78
    %v200 = vunpack.c.l.b16 %v79
    %v201 = vunpack.c.h.b16 %v79
    %v202 = vunpack.c.l.b16 %v80
    %v203 = vunpack.c.h.b16 %v80
    %v204 = vunpack.c.l.b16 %v81
    %v205 = vunpack.c.h.b16 %v81
    %v206 = vunpack.c.l.b16 %v82
    %v207 = vunpack.c.h.b16 %v82
    %v208 = vunpack.c.l.b16 %v83
    %v209 = vunpack.c.h.b16 %v83
    %v210 = vunpack.c.l.b16 %v84
    %v211 = vunpack.c.h.b16 %v84
    %v212 = vunpack.c.l.b16 %v85
    %v213 = vunpack.c.h.b16 %v85
    %v214 = vunpack.c.l.b16 %v86
    %v215 = vunpack.c.h.b16 %v86
    %v216 = vunpack.c.l.b16 %v87
    %v217 = vunpack.c.h.b16 %v87
    %v218 = vunpack.c.l.b16 %v88
    %v219 = vunpack.c.h.b16 %v88
    %v220 = vunpack.c.l.b16 %v89
    %v221 = vunpack.c.h.b16 %v89
    %v222 = vunpack.c.l.b16 %v90
    %v223 = vunpack.c.h.b16 %v90
    %v224 = vunpack.c.l.b16 %v91
    %v225 = vunpack.c.h.b16 %v91
    %v226 = vunpack.c.l.b16 %v92
    %v227 = vunpack.c.h.b16 %v92
    %v228 = vunpack.c.l.b16 %v93
    %v229 = vunpack.c.h.b16 %v93
    %v230 = vunpack.c.l.b16 %v94
    %v231 = vunpack.c.h.b16 %v94
    %v232 = vunpack.c.l.b16 %v95
    %v233 = vunpack.c.h.b16 %v95
    %v234 = vunpack.c.l.b16 %v96
    %v235 = vunpack.c.h.b16 %v96
    %v236 = vunpack.c.l.b16 %v97
    %v237 = vunpack.c.h.b16 %v97
    %v238 = vunpack.c.l.b16 %v98
    %v239 = vunpack.c.h.b16 %v98
    %v240 = vunpack.c.l.b16 %v99
    %v241 = vunpack.c.h.b16 %v99
    %v242 = vpack.c.b16 %v182, %v178
    %v243 = vpack.c.b16 %v183, %v179
    %v244 = vpack.c.b16 %v184, %v180
    %v245 = vpack.c.b16 %v185, %v181
    %v246 = vpack.c.b16 %v190, %v186
    %v247 = vpack.c.b16 %v191, %v187
    %v248 = vpack.c.b16 %v192, %v188
    %v249 = vpack.c.b16 %v193, %v189
    %v250 = vpack.c.b16 %v198, %v194
    %v251 = vpack.c.b16 %v199, %v195
    %v252 = vpack.c.b16 %v200, %v196
    %v253 = vpack.c.b16 %v201, %v197
    %v254 = vpack.c.b16 %v206, %v202
    %v255 = vpack.c.b16 %v207, %v203
    %v256 = vpack.c.b16 %v208, %v204
    %v257 = vpack.c.b16 %v209, %v205
    %v258 = vpack.c.b16 %v214, %v210
    %v259 = vpack.c.b16 %v215, %v211
    %v260 = vpack.c.b16 %v216, %v212
    %v261 = vpack.c.b16 %v217, %v213
    %v262 = vpack.c.b16 %v222, %v218
    %v263 = vpack.c.b16 %v223, %v219
    %v264 = vpack.c.b16 %v224, %v220
    %v265 = vpack.c.b16 %v225, %v221
    %v266 = vpack.c.b16 %v230, %v226
    %v267 = vpack.c.b16 %v231, %v227
    %v268 = vpack.c.b16 %v232, %v228
    %v269 = vpack.c.b16 %v233, %v229
    %v270 = vpack.c.b16 %v238, %v234
    %v271 = vpack.c.b16 %v239, %v235
    %v272 = vpack.c.b16 %v240, %v236
    %v273 = vpack.c.b16 %v241, %v237
    %306 = vmatprep.subr.bf16.mxu0 %v271
    %307 = vmatpush1.bf16.msra.mxu0 %v270
    %308 = vmatprep.subr.bf16.mxu0 %v267
    %309 = vmatpush1.bf16.msra.mxu0 %v266
    %310 = vmatprep.subr.bf16.mxu0 %v263
    %311 = vmatpush1.bf16.msra.mxu0 %v262
    %312 = vmatprep.subr.bf16.mxu0 %v259
    %313 = vmatpush1.bf16.msra.mxu0 %v258
    %314 = vmatprep.subr.bf16.mxu0 %v255
    %315 = vmatpush1.bf16.msra.mxu0 %v254
    %316 = vmatprep.subr.bf16.mxu0 %v251
    %317 = vmatpush1.bf16.msra.mxu0 %v250
    %318 = vmatprep.subr.bf16.mxu0 %v247
    %319 = vmatpush1.bf16.msra.mxu0 %v246
    %320 = vmatprep.subr.bf16.mxu0 %v243
    %321 = vmatpush1.bf16.msra.mxu0 %v242
    %322 = vmatprep.subr.bf16.mxu0 0
    %323 = vmatpush2.bf16.msra.mxu0 0
    %324 = vmatprep.subr.bf16.mxu0 0
    %325 = vmatpush2.bf16.msra.mxu0 0
    %326 = vmatprep.subr.bf16.mxu0 0
    %327 = vmatpush2.bf16.msra.mxu0 0
    %328 = vmatprep.subr.bf16.mxu0 0
    %329 = vmatpush2.bf16.msra.mxu0 0
    %330 = vmatprep.subr.bf16.mxu0 0
    %331 = vmatpush2.bf16.msra.mxu0 0
    %332 = vmatprep.subr.bf16.mxu0 0
    %333 = vmatpush2.bf16.msra.mxu0 0
    %334 = vmatprep.subr.bf16.mxu0 0
    %335 = vmatpush2.bf16.msra.mxu0 0
    %336 = vmatprep.subr.bf16.mxu0 0
    %337 = vmatpush2.bf16.msra.mxu0 0
    %338 = vmatprep.mubr.bf16.mxu0 0
    %339 = vmatmul.mubr.bf16.gmra.mxu0 %v138
    %v340 = vpop.f32.mrf.mxu0
    %v341 = vadd.f32 %v105, %v340
    %v342 = vpop.f32.mrf.mxu0
    %v343 = vadd.f32 %v109, %v342
    %v344 = vpop.f32.mrf.mxu0
    %v345 = vadd.f32 %v105, %v344
    %v346 = vpop.f32.mrf.mxu0
    %v347 = vadd.f32 %v109, %v346
    %348 = vmatprep.mubr.bf16.mxu0 0
    %349 = vmatmul.mubr.bf16.gmra.mxu0 %v139
    %v350 = vpop.f32.mrf.mxu0
    %v351 = vadd.f32 %v105, %v350
    %v352 = vpop.f32.mrf.mxu0
    %v353 = vadd.f32 %v109, %v352
    %v354 = vpop.f32.mrf.mxu0
    %v355 = vadd.f32 %v105, %v354
    %v356 = vpop.f32.mrf.mxu0
    %v357 = vadd.f32 %v109, %v356
    %358 = vmatprep.mubr.bf16.mxu0 0
    %359 = vmatmul.mubr.bf16.gmra.mxu0 %v140
    %v360 = vpop.f32.mrf.mxu0
    %v361 = vadd.f32 %v105, %v360
    %v362 = vpop.f32.mrf.mxu0
    %v363 = vadd.f32 %v109, %v362
    %v364 = vpop.f32.mrf.mxu0
    %v365 = vadd.f32 %v105, %v364
    %v366 = vpop.f32.mrf.mxu0
    %v367 = vadd.f32 %v109, %v366
    %368 = vmatprep.mubr.bf16.mxu0 0
    %369 = vmatmul.mubr.bf16.gmra.mxu0 %v141
    %v370 = vpop.f32.mrf.mxu0
    %v371 = vadd.f32 %v105, %v370
    %v372 = vpop.f32.mrf.mxu0
    %v373 = vadd.f32 %v109, %v372
    %v374 = vpop.f32.mrf.mxu0
    %v375 = vadd.f32 %v105, %v374
    %v376 = vpop.f32.mrf.mxu0
    %v377 = vadd.f32 %v109, %v376
    %378 = vdwg.mxu0
    %379 = vmatprep.subr.bf16.mxu0 %v273
    %380 = vmatpush1.bf16.msra.mxu0 %v272
    %381 = vmatprep.subr.bf16.mxu0 %v269
    %382 = vmatpush1.bf16.msra.mxu0 %v268
    %383 = vmatprep.subr.bf16.mxu0 %v265
    %384 = vmatpush1.bf16.msra.mxu0 %v264
    %385 = vmatprep.subr.bf16.mxu0 %v261
    %386 = vmatpush1.bf16.msra.mxu0 %v260
    %387 = vmatprep.subr.bf16.mxu0 %v257
    %388 = vmatpush1.bf16.msra.mxu0 %v256
    %389 = vmatprep.subr.bf16.mxu0 %v253
    %390 = vmatpush1.bf16.msra.mxu0 %v252
    %391 = vmatprep.subr.bf16.mxu0 %v249
    %392 = vmatpush1.bf16.msra.mxu0 %v248
    %393 = vmatprep.subr.bf16.mxu0 %v245
    %394 = vmatpush1.bf16.msra.mxu0 %v244
    %395 = vmatprep.subr.bf16.mxu0 0
    %396 = vmatpush2.bf16.msra.mxu0 0
    %397 = vmatprep.subr.bf16.mxu0 0
    %398 = vmatpush2.bf16.msra.mxu0 0
    %399 = vmatprep.subr.bf16.mxu0 0
    %400 = vmatpush2.bf16.msra.mxu0 0
    %401 = vmatprep.subr.bf16.mxu0 0
    %402 = vmatpush2.bf16.msra.mxu0 0
    %403 = vmatprep.subr.bf16.mxu0 0
    %404 = vmatpush2.bf16.msra.mxu0 0
    %405 = vmatprep.subr.bf16.mxu0 0
    %406 = vmatpush2.bf16.msra.mxu0 0
    %407 = vmatprep.subr.bf16.mxu0 0
    %408 = vmatpush2.bf16.msra.mxu0 0
    %409 = vmatprep.subr.bf16.mxu0 0
    %410 = vmatpush2.bf16.msra.mxu0 0
    %411 = vmatprep.mubr.bf16.mxu0 0
    %412 = vmatmul.mubr.bf16.gmra.mxu0 %v138
    %v413 = vpop.f32.mrf.mxu0
    %v414 = vadd.f32 %v113, %v413
    %v415 = vpop.f32.mrf.mxu0
    %v416 = vadd.f32 %v117, %v415
    %v417 = vpop.f32.mrf.mxu0
    %v418 = vadd.f32 %v113, %v417
    %v419 = vpop.f32.mrf.mxu0
    %v420 = vadd.f32 %v117, %v419
    %421 = vmatprep.mubr.bf16.mxu0 0
    %422 = vmatmul.mubr.bf16.gmra.mxu0 %v139
    %v423 = vpop.f32.mrf.mxu0
    %v424 = vadd.f32 %v113, %v423
    %v425 = vpop.f32.mrf.mxu0
    %v426 = vadd.f32 %v117, %v425
    %v427 = vpop.f32.mrf.mxu0
    %v428 = vadd.f32 %v113, %v427
    %v429 = vpop.f32.mrf.mxu0
    %v430 = vadd.f32 %v117, %v429
    %431 = vmatprep.mubr.bf16.mxu0 0
    %432 = vmatmul.mubr.bf16.gmra.mxu0 %v140
    %v433 = vpop.f32.mrf.mxu0
    %v434 = vadd.f32 %v113, %v433
    %v435 = vpop.f32.mrf.mxu0
    %v436 = vadd.f32 %v117, %v435
    %v437 = vpop.f32.mrf.mxu0
    %v438 = vadd.f32 %v113, %v437
    %v439 = vpop.f32.mrf.mxu0
    %v440 = vadd.f32 %v117, %v439
    %441 = vmatprep.mubr.bf16.mxu0 0
    %442 = vmatmul.mubr.bf16.gmra.mxu0 %v141
    %v443 = vpop.f32.mrf.mxu0
    %v444 = vadd.f32 %v113, %v443
    %v445 = vpop.f32.mrf.mxu0
    %v446 = vadd.f32 %v117, %v445
    %v447 = vpop.f32.mrf.mxu0
    %v448 = vadd.f32 %v113, %v447
    %v449 = vpop.f32.mrf.mxu0
    %v450 = vadd.f32 %v117, %v449
    %451 = vdwg.mxu0
    %452 = vst [vmem:[#allocation2] sm:$0xff] %v341
    %453 = vst [vmem:[#allocation2 + $0x8] sm:$0xff] %v343
    %454 = vst [vmem:[#allocation2 + $0x10] sm:$0xff] %v414
    %455 = vst [vmem:[#allocation2 + $0x18] sm:$0xff] %v416
    %456 = vst [vmem:[#allocation2 + $0x20] sm:$0xff] %v345
    %457 = vst [vmem:[#allocation2 + $0x28] sm:$0xff] %v347
    %458 = vst [vmem:[#allocation2 + $0x30] sm:$0xff] %v418
    %459 = vst [vmem:[#allocation2 + $0x38] sm:$0xff] %v420
    %460 = vst [vmem:[#allocation2 + $0x40] sm:$0xff] %v351
    %461 = vst [vmem:[#allocation2 + $0x48] sm:$0xff] %v353
    %462 = vst [vmem:[#allocation2 + $0x50] sm:$0xff] %v424
    %463 = vst [vmem:[#allocation2 + $0x58] sm:$0xff] %v426
    %464 = vst [vmem:[#allocation2 + $0x60] sm:$0xff] %v355
    %465 = vst [vmem:[#allocation2 + $0x68] sm:$0xff] %v357
    %466 = vst [vmem:[#allocation2 + $0x70] sm:$0xff] %v428
    %467 = vst [vmem:[#allocation2 + $0x78] sm:$0xff] %v430
    %468 = vst [vmem:[#allocation2 + $0x80] sm:$0xff] %v361
    %469 = vst [vmem:[#allocation2 + $0x88] sm:$0xff] %v363
    %470 = vst [vmem:[#allocation2 + $0x90] sm:$0xff] %v434
    %471 = vst [vmem:[#allocation2 + $0x98] sm:$0xff] %v436
    %472 = vst [vmem:[#allocation2 + $0xa0] sm:$0xff] %v365
    %473 = vst [vmem:[#allocation2 + $0xa8] sm:$0xff] %v367
    %474 = vst [vmem:[#allocation2 + $0xb0] sm:$0xff] %v438
    %475 = vst [vmem:[#allocation2 + $0xb8] sm:$0xff] %v440
    %476 = vst [vmem:[#allocation2 + $0xc0] sm:$0xff] %v371
    %477 = vst [vmem:[#allocation2 + $0xc8] sm:$0xff] %v373
    %478 = vst [vmem:[#allocation2 + $0xd0] sm:$0xff] %v444
    %479 = vst [vmem:[#allocation2 + $0xd8] sm:$0xff] %v446
    %480 = vst [vmem:[#allocation2 + $0xe0] sm:$0xff] %v375
    %481 = vst [vmem:[#allocation2 + $0xe8] sm:$0xff] %v377
    %482 = vst [vmem:[#allocation2 + $0xf0] sm:$0xff] %v448
    %483 = vst [vmem:[#allocation2 + $0xf8] sm:$0xff] %v450
    %s484 = smul.u32 0, 4
    %s485 = smul.addr %s484, 8
    %s486 = scalar_lea.vmem [#allocation2], %s485
    %v487 = vld [vmem:[%s486] sm:$0xff]
    %v488 = vld [vmem:[%s486 + $0x8] sm:$0xff]
    %v489 = vld [vmem:[%s486 + $0x10] sm:$0xff]
    %v490 = vld [vmem:[%s486 + $0x18] sm:$0xff]
    %v491 = vld [vmem:[#allocation6] sm:$0xff]
    %v492 = vld [vmem:[#allocation6 + $0x8] sm:$0xff]
    %v493 = vld [vmem:[#allocation6 + $0x10] sm:$0xff]
    %v494 = vld [vmem:[#allocation6 + $0x18] sm:$0xff]
    %v495 = vld [vmem:[#allocation6 + $0x20] sm:$0xff]
    %v496 = vld [vmem:[#allocation6 + $0x28] sm:$0xff]
    %v497 = vld [vmem:[#allocation6 + $0x30] sm:$0xff]
    %v498 = vld [vmem:[#allocation6 + $0x38] sm:$0xff]
    %v499 = vld [vmem:[#allocation6 + $0x40] sm:$0xff]
    %v500 = vld [vmem:[#allocation6 + $0x48] sm:$0xff]
    %v501 = vld [vmem:[#allocation6 + $0x50] sm:$0xff]
    %v502 = vld [vmem:[#allocation6 + $0x58] sm:$0xff]
    %v503 = vld [vmem:[#allocation6 + $0x60] sm:$0xff]
    %v504 = vld [vmem:[#allocation6 + $0x68] sm:$0xff]
    %v505 = vld [vmem:[#allocation6 + $0x70] sm:$0xff]
    %v506 = vld [vmem:[#allocation6 + $0x78] sm:$0xff]
    %v507 = vld [vmem:[#allocation6 + $0x80] sm:$0xff]
    %v508 = vld [vmem:[#allocation6 + $0x88] sm:$0xff]
    %v509 = vld [vmem:[#allocation6 + $0x90] sm:$0xff]
    %v510 = vld [vmem:[#allocation6 + $0x98] sm:$0xff]
    %v511 = vld [vmem:[#allocation6 + $0xa0] sm:$0xff]
    %v512 = vld [vmem:[#allocation6 + $0xa8] sm:$0xff]
    %v513 = vld [vmem:[#allocation6 + $0xb0] sm:$0xff]
    %v514 = vld [vmem:[#allocation6 + $0xb8] sm:$0xff]
    %v515 = vld [vmem:[#allocation6 + $0xc0] sm:$0xff]
    %v516 = vld [vmem:[#allocation6 + $0xc8] sm:$0xff]
    %v517 = vld [vmem:[#allocation6 + $0xd0] sm:$0xff]
    %v518 = vld [vmem:[#allocation6 + $0xd8] sm:$0xff]
    %v519 = vld [vmem:[#allocation6 + $0xe0] sm:$0xff]
    %v520 = vld [vmem:[#allocation6 + $0xe8] sm:$0xff]
    %v521 = vld [vmem:[#allocation6 + $0xf0] sm:$0xff]
    %v522 = vld [vmem:[#allocation6 + $0xf8] sm:$0xff]
    %v555 = vunpack.c.l.b16 %v491
    %v556 = vunpack.c.h.b16 %v491
    %v557 = vunpack.c.l.b16 %v492
    %v558 = vunpack.c.h.b16 %v492
    %v559 = vunpack.c.l.b16 %v493
    %v560 = vunpack.c.h.b16 %v493
    %v561 = vunpack.c.l.b16 %v494
    %v562 = vunpack.c.h.b16 %v494
    %v563 = vunpack.c.l.b16 %v495
    %v564 = vunpack.c.h.b16 %v495
    %v565 = vunpack.c.l.b16 %v496
    %v566 = vunpack.c.h.b16 %v496
    %v567 = vunpack.c.l.b16 %v497
    %v568 = vunpack.c.h.b16 %v497
    %v569 = vunpack.c.l.b16 %v498
    %v570 = vunpack.c.h.b16 %v498
    %v571 = vunpack.c.l.b16 %v499
    %v572 = vunpack.c.h.b16 %v499
    %v573 = vunpack.c.l.b16 %v500
    %v574 = vunpack.c.h.b16 %v500
    %v575 = vunpack.c.l.b16 %v501
    %v576 = vunpack.c.h.b16 %v501
    %v577 = vunpack.c.l.b16 %v502
    %v578 = vunpack.c.h.b16 %v502
    %v579 = vunpack.c.l.b16 %v503
    %v580 = vunpack.c.h.b16 %v503
    %v581 = vunpack.c.l.b16 %v504
    %v582 = vunpack.c.h.b16 %v504
    %v583 = vunpack.c.l.b16 %v505
    %v584 = vunpack.c.h.b16 %v505
    %v585 = vunpack.c.l.b16 %v506
    %v586 = vunpack.c.h.b16 %v506
    %v587 = vunpack.c.l.b16 %v507
    %v588 = vunpack.c.h.b16 %v507
    %v589 = vunpack.c.l.b16 %v508
    %v590 = vunpack.c.h.b16 %v508
    %v591 = vunpack.c.l.b16 %v509
    %v592 = vunpack.c.h.b16 %v509
    %v593 = vunpack.c.l.b16 %v510
    %v594 = vunpack.c.h.b16 %v510
    %v595 = vunpack.c.l.b16 %v511
    %v596 = vunpack.c.h.b16 %v511
    %v597 = vunpack.c.l.b16 %v512
    %v598 = vunpack.c.h.b16 %v512
    %v599 = vunpack.c.l.b16 %v513
    %v600 = vunpack.c.h.b16 %v513
    %v601 = vunpack.c.l.b16 %v514
    %v602 = vunpack.c.h.b16 %v514
    %v603 = vunpack.c.l.b16 %v515
    %v604 = vunpack.c.h.b16 %v515
    %v605 = vunpack.c.l.b16 %v516
    %v606 = vunpack.c.h.b16 %v516
    %v607 = vunpack.c.l.b16 %v517
    %v608 = vunpack.c.h.b16 %v517
    %v609 = vunpack.c.l.b16 %v518
    %v610 = vunpack.c.h.b16 %v518
    %v611 = vunpack.c.l.b16 %v519
    %v612 = vunpack.c.h.b16 %v519
    %v613 = vunpack.c.l.b16 %v520
    %v614 = vunpack.c.h.b16 %v520
    %v615 = vunpack.c.l.b16 %v521
    %v616 = vunpack.c.h.b16 %v521
    %v617 = vunpack.c.l.b16 %v522
    %v618 = vunpack.c.h.b16 %v522
    %v619 = vpack.c.b16 %v559, %v555
    %v620 = vpack.c.b16 %v560, %v556
    %v621 = vpack.c.b16 %v561, %v557
    %v622 = vpack.c.b16 %v562, %v558
    %v623 = vpack.c.b16 %v567, %v563
    %v624 = vpack.c.b16 %v568, %v564
    %v625 = vpack.c.b16 %v569, %v565
    %v626 = vpack.c.b16 %v570, %v566
    %v627 = vpack.c.b16 %v575, %v571
    %v628 = vpack.c.b16 %v576, %v572
    %v629 = vpack.c.b16 %v577, %v573
    %v630 = vpack.c.b16 %v578, %v574
    %v631 = vpack.c.b16 %v583, %v579
    %v632 = vpack.c.b16 %v584, %v580
    %v633 = vpack.c.b16 %v585, %v581
    %v634 = vpack.c.b16 %v586, %v582
    %v635 = vpack.c.b16 %v591, %v587
    %v636 = vpack.c.b16 %v592, %v588
    %v637 = vpack.c.b16 %v593, %v589
    %v638 = vpack.c.b16 %v594, %v590
    %v639 = vpack.c.b16 %v599, %v595
    %v640 = vpack.c.b16 %v600, %v596
    %v641 = vpack.c.b16 %v601, %v597
    %v642 = vpack.c.b16 %v602, %v598
    %v643 = vpack.c.b16 %v607, %v603
    %v644 = vpack.c.b16 %v608, %v604
    %v645 = vpack.c.b16 %v609, %v605
    %v646 = vpack.c.b16 %v610, %v606
    %v647 = vpack.c.b16 %v615, %v611
    %v648 = vpack.c.b16 %v616, %v612
    %v649 = vpack.c.b16 %v617, %v613
    %v650 = vpack.c.b16 %v618, %v614
    %683 = vmatprep.subr.bf16.mxu0 %v648
    %684 = vmatpush1.bf16.msra.mxu0 %v647
    %685 = vmatprep.subr.bf16.mxu0 %v644
    %686 = vmatpush1.bf16.msra.mxu0 %v643
    %687 = vmatprep.subr.bf16.mxu0 %v640
    %688 = vmatpush1.bf16.msra.mxu0 %v639
    %689 = vmatprep.subr.bf16.mxu0 %v636
    %690 = vmatpush1.bf16.msra.mxu0 %v635
    %691 = vmatprep.subr.bf16.mxu0 %v632
    %692 = vmatpush1.bf16.msra.mxu0 %v631
    %693 = vmatprep.subr.bf16.mxu0 %v628
    %694 = vmatpush1.bf16.msra.mxu0 %v627
    %695 = vmatprep.subr.bf16.mxu0 %v624
    %696 = vmatpush1.bf16.msra.mxu0 %v623
    %697 = vmatprep.subr.bf16.mxu0 %v620
    %698 = vmatpush1.bf16.msra.mxu0 %v619
    %699 = vmatprep.subr.bf16.mxu0 0
    %700 = vmatpush2.bf16.msra.mxu0 0
    %701 = vmatprep.subr.bf16.mxu0 0
    %702 = vmatpush2.bf16.msra.mxu0 0
    %703 = vmatprep.subr.bf16.mxu0 0
    %704 = vmatpush2.bf16.msra.mxu0 0
    %705 = vmatprep.subr.bf16.mxu0 0
    %706 = vmatpush2.bf16.msra.mxu0 0
    %707 = vmatprep.subr.bf16.mxu0 0
    %708 = vmatpush2.bf16.msra.mxu0 0
    %709 = vmatprep.subr.bf16.mxu0 0
    %710 = vmatpush2.bf16.msra.mxu0 0
    %711 = vmatprep.subr.bf16.mxu0 0
    %712 = vmatpush2.bf16.msra.mxu0 0
    %713 = vmatprep.subr.bf16.mxu0 0
    %714 = vmatpush2.bf16.msra.mxu0 0
    %715 = vmatprep.mubr.bf16.mxu0 0
    %716 = vmatmul.mubr.bf16.gmra.mxu0 0
    %v717 = vpop.f32.mrf.mxu0
    %v718 = vadd.f32 0.0, %v717
    %v719 = vpop.f32.mrf.mxu0
    %v720 = vadd.f32 0.0, %v719
    %v721 = vpop.f32.mrf.mxu0
    %v722 = vpop.f32.mrf.mxu0
    %723 = vdwg.mxu0
    %724 = vmatprep.subr.bf16.mxu0 %v650
    %725 = vmatpush1.bf16.msra.mxu0 %v649
    %726 = vmatprep.subr.bf16.mxu0 %v646
    %727 = vmatpush1.bf16.msra.mxu0 %v645
    %728 = vmatprep.subr.bf16.mxu0 %v642
    %729 = vmatpush1.bf16.msra.mxu0 %v641
    %730 = vmatprep.subr.bf16.mxu0 %v638
    %731 = vmatpush1.bf16.msra.mxu0 %v637
    %732 = vmatprep.subr.bf16.mxu0 %v634
    %733 = vmatpush1.bf16.msra.mxu0 %v633
    %734 = vmatprep.subr.bf16.mxu0 %v630
    %735 = vmatpush1.bf16.msra.mxu0 %v629
    %736 = vmatprep.subr.bf16.mxu0 %v626
    %737 = vmatpush1.bf16.msra.mxu0 %v625
    %738 = vmatprep.subr.bf16.mxu0 %v622
    %739 = vmatpush1.bf16.msra.mxu0 %v621
    %740 = vmatprep.subr.bf16.mxu0 0
    %741 = vmatpush2.bf16.msra.mxu0 0
    %742 = vmatprep.subr.bf16.mxu0 0
    %743 = vmatpush2.bf16.msra.mxu0 0
    %744 = vmatprep.subr.bf16.mxu0 0
    %745 = vmatpush2.bf16.msra.mxu0 0
    %746 = vmatprep.subr.bf16.mxu0 0
    %747 = vmatpush2.bf16.msra.mxu0 0
    %748 = vmatprep.subr.bf16.mxu0 0
    %749 = vmatpush2.bf16.msra.mxu0 0
    %750 = vmatprep.subr.bf16.mxu0 0
    %751 = vmatpush2.bf16.msra.mxu0 0
    %752 = vmatprep.subr.bf16.mxu0 0
    %753 = vmatpush2.bf16.msra.mxu0 0
    %754 = vmatprep.subr.bf16.mxu0 0
    %755 = vmatpush2.bf16.msra.mxu0 0
    %756 = vmatprep.mubr.bf16.mxu0 0
    %757 = vmatmul.mubr.bf16.gmra.mxu0 0
    %v758 = vpop.f32.mrf.mxu0
    %v759 = vadd.f32 0.0, %v758
    %v760 = vpop.f32.mrf.mxu0
    %v761 = vadd.f32 0.0, %v760
    %v762 = vpop.f32.mrf.mxu0
    %v763 = vpop.f32.mrf.mxu0
    %764 = vdwg.mxu0
    %v765 = vadd.f32 %v487, %v718
    %v766 = vadd.f32 %v488, %v720
    %v767 = vadd.f32 %v489, %v759
    %v768 = vadd.f32 %v490, %v761
    %v769 = vmul.f32 %v765, 0.5
    %v770 = vmul.f32 %v766, 0.5
    %v771 = vmul.f32 %v767, 0.5
    %v772 = vtanh.pop %v769
    %v773 = vtanh.pop %v770
    %v774 = vtanh.pop %v771
    %v775 = vadd.f32 %v772, 1.0
    %v776 = vadd.f32 %v773, 1.0
    %v777 = vadd.f32 %v774, 1.0
    %v778 = vmul.f32 %v775, 0.5
    %v779 = vmul.f32 %v776, 0.5
    %v780 = vmul.f32 %v777, 0.5
    %v781 = vtanh.pop %v768
    %v782 = vmul.f32 %v779, 0.0
    %v783 = vmul.f32 %v778, %v781
    %v784 = vadd.f32 %v782, %v783
    %v785 = vtanh.pop %v784
    %v786 = vmul.f32 %v780, %v785
    %s787 = smul.u32 1, 4
    %s788 = smul.addr %s787, 8
    %s789 = scalar_lea.vmem [#allocation2], %s788
    %v790 = vld [vmem:[%s789] sm:$0xff]
    %v791 = vld [vmem:[%s789 + $0x8] sm:$0xff]
    %v792 = vld [vmem:[%s789 + $0x10] sm:$0xff]
    %v793 = vld [vmem:[%s789 + $0x18] sm:$0xff]
    %v794 = vpack.c.bf16 %v786, %v786
    %795 = vmatprep.subr.bf16.mxu0 %v648
    %796 = vmatpush1.bf16.msra.mxu0 %v647
    %797 = vmatprep.subr.bf16.mxu0 %v644
    %798 = vmatpush1.bf16.msra.mxu0 %v643
    %799 = vmatprep.subr.bf16.mxu0 %v640
    %800 = vmatpush1.bf16.msra.mxu0 %v639
    %801 = vmatprep.subr.bf16.mxu0 %v636
    %802 = vmatpush1.bf16.msra.mxu0 %v635
    %803 = vmatprep.subr.bf16.mxu0 %v632
    %804 = vmatpush1.bf16.msra.mxu0 %v631
    %805 = vmatprep.subr.bf16.mxu0 %v628
    %806 = vmatpush1.bf16.msra.mxu0 %v627
    %807 = vmatprep.subr.bf16.mxu0 %v624
    %808 = vmatpush1.bf16.msra.mxu0 %v623
    %809 = vmatprep.subr.bf16.mxu0 %v620
    %810 = vmatpush1.bf16.msra.mxu0 %v619
    %811 = vmatprep.subr.bf16.mxu0 0
    %812 = vmatpush2.bf16.msra.mxu0 0
    %813 = vmatprep.subr.bf16.mxu0 0
    %814 = vmatpush2.bf16.msra.mxu0 0
    %815 = vmatprep.subr.bf16.mxu0 0
    %816 = vmatpush2.bf16.msra.mxu0 0
    %817 = vmatprep.subr.bf16.mxu0 0
    %818 = vmatpush2.bf16.msra.mxu0 0
    %819 = vmatprep.subr.bf16.mxu0 0
    %820 = vmatpush2.bf16.msra.mxu0 0
    %821 = vmatprep.subr.bf16.mxu0 0
    %822 = vmatpush2.bf16.msra.mxu0 0
    %823 = vmatprep.subr.bf16.mxu0 0
    %824 = vmatpush2.bf16.msra.mxu0 0
    %825 = vmatprep.subr.bf16.mxu0 0
    %826 = vmatpush2.bf16.msra.mxu0 0
    %827 = vmatprep.mubr.bf16.mxu0 0
    %828 = vmatmul.mubr.bf16.gmra.mxu0 %v794
    %v829 = vpop.f32.mrf.mxu0
    %v830 = vadd.f32 0.0, %v829
    %v831 = vpop.f32.mrf.mxu0
    %v832 = vadd.f32 0.0, %v831
    %v833 = vpop.f32.mrf.mxu0
    %v834 = vpop.f32.mrf.mxu0
    %835 = vdwg.mxu0
    %836 = vmatprep.subr.bf16.mxu0 %v650
    %837 = vmatpush1.bf16.msra.mxu0 %v649
    %838 = vmatprep.subr.bf16.mxu0 %v646
    %839 = vmatpush1.bf16.msra.mxu0 %v645
    %840 = vmatprep.subr.bf16.mxu0 %v642
    %841 = vmatpush1.bf16.msra.mxu0 %v641
    %842 = vmatprep.subr.bf16.mxu0 %v638
    %843 = vmatpush1.bf16.msra.mxu0 %v637
    %844 = vmatprep.subr.bf16.mxu0 %v634
    %845 = vmatpush1.bf16.msra.mxu0 %v633
    %846 = vmatprep.subr.bf16.mxu0 %v630
    %847 = vmatpush1.bf16.msra.mxu0 %v629
    %848 = vmatprep.subr.bf16.mxu0 %v626
    %849 = vmatpush1.bf16.msra.mxu0 %v625
    %850 = vmatprep.subr.bf16.mxu0 %v622
    %851 = vmatpush1.bf16.msra.mxu0 %v621
    %852 = vmatprep.subr.bf16.mxu0 0
    %853 = vmatpush2.bf16.msra.mxu0 0
    %854 = vmatprep.subr.bf16.mxu0 0
    %855 = vmatpush2.bf16.msra.mxu0 0
    %856 = vmatprep.subr.bf16.mxu0 0
    %857 = vmatpush2.bf16.msra.mxu0 0
    %858 = vmatprep.subr.bf16.mxu0 0
    %859 = vmatpush2.bf16.msra.mxu0 0
    %860 = vmatprep.subr.bf16.mxu0 0
    %861 = vmatpush2.bf16.msra.mxu0 0
    %862 = vmatprep.subr.bf16.mxu0 0
    %863 = vmatpush2.bf16.msra.mxu0 0
    %864 = vmatprep.subr.bf16.mxu0 0
    %865 = vmatpush2.bf16.msra.mxu0 0
    %866 = vmatprep.subr.bf16.mxu0 0
    %867 = vmatpush2.bf16.msra.mxu0 0
    %868 = vmatprep.mubr.bf16.mxu0 0
    %869 = vmatmul.mubr.bf16.gmra.mxu0 %v794
    %v870 = vpop.f32.mrf.mxu0
    %v871 = vadd.f32 0.0, %v870
    %v872 = vpop.f32.mrf.mxu0
    %v873 = vadd.f32 0.0, %v872
    %v874 = vpop.f32.mrf.mxu0
    %v875 = vpop.f32.mrf.mxu0
    %876 = vdwg.mxu0
    %v877 = vadd.f32 %v790, %v830
    %v878 = vadd.f32 %v791, %v832
    %v879 = vadd.f32 %v792, %v871
    %v880 = vadd.f32 %v793, %v873
    %v881 = vmul.f32 %v877, 0.5
    %v882 = vmul.f32 %v878, 0.5
    %v883 = vmul.f32 %v879, 0.5
    %v884 = vtanh.pop %v881
    %v885 = vtanh.pop %v882
    %v886 = vtanh.pop %v883
    %v887 = vadd.f32 %v884, 1.0
    %v888 = vadd.f32 %v885, 1.0
    %v889 = vadd.f32 %v886, 1.0
    %v890 = vmul.f32 %v887, 0.5
    %v891 = vmul.f32 %v888, 0.5
    %v892 = vmul.f32 %v889, 0.5
    %v893 = vtanh.pop %v880
    %v894 = vmul.f32 %v891, %v784
    %v895 = vmul.f32 %v890, %v893
    %v896 = vadd.f32 %v894, %v895
    %v897 = vtanh.pop %v896
    %v898 = vmul.f32 %v892, %v897
    %s899 = smul.u32 2, 4
    %s900 = smul.addr %s899, 8
    %s901 = scalar_lea.vmem [#allocation2], %s900
    %v902 = vld [vmem:[%s901] sm:$0xff]
    %v903 = vld [vmem:[%s901 + $0x8] sm:$0xff]
    %v904 = vld [vmem:[%s901 + $0x10] sm:$0xff]
    %v905 = vld [vmem:[%s901 + $0x18] sm:$0xff]
    %v906 = vpack.c.bf16 %v898, %v898
    %907 = vmatprep.subr.bf16.mxu0 %v648
    %908 = vmatpush1.bf16.msra.mxu0 %v647
    %909 = vmatprep.subr.bf16.mxu0 %v644
    %910 = vmatpush1.bf16.msra.mxu0 %v643
    %911 = vmatprep.subr.bf16.mxu0 %v640
    %912 = vmatpush1.bf16.msra.mxu0 %v639
    %913 = vmatprep.subr.bf16.mxu0 %v636
    %914 = vmatpush1.bf16.msra.mxu0 %v635
    %915 = vmatprep.subr.bf16.mxu0 %v632
    %916 = vmatpush1.bf16.msra.mxu0 %v631
    %917 = vmatprep.subr.bf16.mxu0 %v628
    %918 = vmatpush1.bf16.msra.mxu0 %v627
    %919 = vmatprep.subr.bf16.mxu0 %v624
    %920 = vmatpush1.bf16.msra.mxu0 %v623
    %921 = vmatprep.subr.bf16.mxu0 %v620
    %922 = vmatpush1.bf16.msra.mxu0 %v619
    %923 = vmatprep.subr.bf16.mxu0 0
    %924 = vmatpush2.bf16.msra.mxu0 0
    %925 = vmatprep.subr.bf16.mxu0 0
    %926 = vmatpush2.bf16.msra.mxu0 0
    %927 = vmatprep.subr.bf16.mxu0 0
    %928 = vmatpush2.bf16.msra.mxu0 0
    %929 = vmatprep.subr.bf16.mxu0 0
    %930 = vmatpush2.bf16.msra.mxu0 0
    %931 = vmatprep.subr.bf16.mxu0 0
    %932 = vmatpush2.bf16.msra.mxu0 0
    %933 = vmatprep.subr.bf16.mxu0 0
    %934 = vmatpush2.bf16.msra.mxu0 0
    %935 = vmatprep.subr.bf16.mxu0 0
    %936 = vmatpush2.bf16.msra.mxu0 0
    %937 = vmatprep.subr.bf16.mxu0 0
    %938 = vmatpush2.bf16.msra.mxu0 0
    %939 = vmatprep.mubr.bf16.mxu0 0
    %940 = vmatmul.mubr.bf16.gmra.mxu0 %v906
    %v941 = vpop.f32.mrf.mxu0
    %v942 = vadd.f32 0.0, %v941
    %v943 = vpop.f32.mrf.mxu0
    %v944 = vadd.f32 0.0, %v943
    %v945 = vpop.f32.mrf.mxu0
    %v946 = vpop.f32.mrf.mxu0
    %947 = vdwg.mxu0
    %948 = vmatprep.subr.bf16.mxu0 %v650
    %949 = vmatpush1.bf16.msra.mxu0 %v649
    %950 = vmatprep.subr.bf16.mxu0 %v646
    %951 = vmatpush1.bf16.msra.mxu0 %v645
    %952 = vmatprep.subr.bf16.mxu0 %v642
    %953 = vmatpush1.bf16.msra.mxu0 %v641
    %954 = vmatprep.subr.bf16.mxu0 %v638
    %955 = vmatpush1.bf16.msra.mxu0 %v637
    %956 = vmatprep.subr.bf16.mxu0 %v634
    %957 = vmatpush1.bf16.msra.mxu0 %v633
    %958 = vmatprep.subr.bf16.mxu0 %v630
    %959 = vmatpush1.bf16.msra.mxu0 %v629
    %960 = vmatprep.subr.bf16.mxu0 %v626
    %961 = vmatpush1.bf16.msra.mxu0 %v625
    %962 = vmatprep.subr.bf16.mxu0 %v622
    %963 = vmatpush1.bf16.msra.mxu0 %v621
    %964 = vmatprep.subr.bf16.mxu0 0
    %965 = vmatpush2.bf16.msra.mxu0 0
    %966 = vmatprep.subr.bf16.mxu0 0
    %967 = vmatpush2.bf16.msra.mxu0 0
    %968 = vmatprep.subr.bf16.mxu0 0
    %969 = vmatpush2.bf16.msra.mxu0 0
    %970 = vmatprep.subr.bf16.mxu0 0
    %971 = vmatpush2.bf16.msra.mxu0 0
    %972 = vmatprep.subr.bf16.mxu0 0
    %973 = vmatpush2.bf16.msra.mxu0 0
    %974 = vmatprep.subr.bf16.mxu0 0
    %975 = vmatpush2.bf16.msra.mxu0 0
    %976 = vmatprep.subr.bf16.mxu0 0
    %977 = vmatpush2.bf16.msra.mxu0 0
    %978 = vmatprep.subr.bf16.mxu0 0
    %979 = vmatpush2.bf16.msra.mxu0 0
    %980 = vmatprep.mubr.bf16.mxu0 0
    %981 = vmatmul.mubr.bf16.gmra.mxu0 %v906
    %v982 = vpop.f32.mrf.mxu0
    %v983 = vadd.f32 0.0, %v982
    %v984 = vpop.f32.mrf.mxu0
    %v985 = vadd.f32 0.0, %v984
    %v986 = vpop.f32.mrf.mxu0
    %v987 = vpop.f32.mrf.mxu0
    %988 = vdwg.mxu0
    %v989 = vadd.f32 %v902, %v942
    %v990 = vadd.f32 %v903, %v944
    %v991 = vadd.f32 %v904, %v983
    %v992 = vadd.f32 %v905, %v985
    %v993 = vmul.f32 %v989, 0.5
    %v994 = vmul.f32 %v990, 0.5
    %v995 = vmul.f32 %v991, 0.5
    %v996 = vtanh.pop %v993
    %v997 = vtanh.pop %v994
    %v998 = vtanh.pop %v995
    %v999 = vadd.f32 %v996, 1.0
    %v1000 = vadd.f32 %v997, 1.0
    %v1001 = vadd.f32 %v998, 1.0
    %v1002 = vmul.f32 %v999, 0.5
    %v1003 = vmul.f32 %v1000, 0.5
    %v1004 = vmul.f32 %v1001, 0.5
    %v1005 = vtanh.pop %v992
    %v1006 = vmul.f32 %v1003, %v896
    %v1007 = vmul.f32 %v1002, %v1005
    %v1008 = vadd.f32 %v1006, %v1007
    %v1009 = vtanh.pop %v1008
    %v1010 = vmul.f32 %v1004, %v1009
    %s1011 = smul.u32 3, 4
    %s1012 = smul.addr %s1011, 8
    %s1013 = scalar_lea.vmem [#allocation2], %s1012
    %v1014 = vld [vmem:[%s1013] sm:$0xff]
    %v1015 = vld [vmem:[%s1013 + $0x8] sm:$0xff]
    %v1016 = vld [vmem:[%s1013 + $0x10] sm:$0xff]
    %v1017 = vld [vmem:[%s1013 + $0x18] sm:$0xff]
    %v1018 = vpack.c.bf16 %v1010, %v1010
    %1019 = vmatprep.subr.bf16.mxu0 %v648
    %1020 = vmatpush1.bf16.msra.mxu0 %v647
    %1021 = vmatprep.subr.bf16.mxu0 %v644
    %1022 = vmatpush1.bf16.msra.mxu0 %v643
    %1023 = vmatprep.subr.bf16.mxu0 %v640
    %1024 = vmatpush1.bf16.msra.mxu0 %v639
    %1025 = vmatprep.subr.bf16.mxu0 %v636
    %1026 = vmatpush1.bf16.msra.mxu0 %v635
    %1027 = vmatprep.subr.bf16.mxu0 %v632
    %1028 = vmatpush1.bf16.msra.mxu0 %v631
    %1029 = vmatprep.subr.bf16.mxu0 %v628
    %1030 = vmatpush1.bf16.msra.mxu0 %v627
    %1031 = vmatprep.subr.bf16.mxu0 %v624
    %1032 = vmatpush1.bf16.msra.mxu0 %v623
    %1033 = vmatprep.subr.bf16.mxu0 %v620
    %1034 = vmatpush1.bf16.msra.mxu0 %v619
    %1035 = vmatprep.subr.bf16.mxu0 0
    %1036 = vmatpush2.bf16.msra.mxu0 0
    %1037 = vmatprep.subr.bf16.mxu0 0
    %1038 = vmatpush2.bf16.msra.mxu0 0
    %1039 = vmatprep.subr.bf16.mxu0 0
    %1040 = vmatpush2.bf16.msra.mxu0 0
    %1041 = vmatprep.subr.bf16.mxu0 0
    %1042 = vmatpush2.bf16.msra.mxu0 0
    %1043 = vmatprep.subr.bf16.mxu0 0
    %1044 = vmatpush2.bf16.msra.mxu0 0
    %1045 = vmatprep.subr.bf16.mxu0 0
    %1046 = vmatpush2.bf16.msra.mxu0 0
    %1047 = vmatprep.subr.bf16.mxu0 0
    %1048 = vmatpush2.bf16.msra.mxu0 0
    %1049 = vmatprep.subr.bf16.mxu0 0
    %1050 = vmatpush2.bf16.msra.mxu0 0
    %1051 = vmatprep.mubr.bf16.mxu0 0
    %1052 = vmatmul.mubr.bf16.gmra.mxu0 %v1018
    %v1053 = vpop.f32.mrf.mxu0
    %v1054 = vadd.f32 0.0, %v1053
    %v1055 = vpop.f32.mrf.mxu0
    %v1056 = vadd.f32 0.0, %v1055
    %v1057 = vpop.f32.mrf.mxu0
    %v1058 = vpop.f32.mrf.mxu0
    %1059 = vdwg.mxu0
    %1060 = vmatprep.subr.bf16.mxu0 %v650
    %1061 = vmatpush1.bf16.msra.mxu0 %v649
    %1062 = vmatprep.subr.bf16.mxu0 %v646
    %1063 = vmatpush1.bf16.msra.mxu0 %v645
    %1064 = vmatprep.subr.bf16.mxu0 %v642
    %1065 = vmatpush1.bf16.msra.mxu0 %v641
    %1066 = vmatprep.subr.bf16.mxu0 %v638
    %1067 = vmatpush1.bf16.msra.mxu0 %v637
    %1068 = vmatprep.subr.bf16.mxu0 %v634
    %1069 = vmatpush1.bf16.msra.mxu0 %v633
    %1070 = vmatprep.subr.bf16.mxu0 %v630
    %1071 = vmatpush1.bf16.msra.mxu0 %v629
    %1072 = vmatprep.subr.bf16.mxu0 %v626
    %1073 = vmatpush1.bf16.msra.mxu0 %v625
    %1074 = vmatprep.subr.bf16.mxu0 %v622
    %1075 = vmatpush1.bf16.msra.mxu0 %v621
    %1076 = vmatprep.subr.bf16.mxu0 0
    %1077 = vmatpush2.bf16.msra.mxu0 0
    %1078 = vmatprep.subr.bf16.mxu0 0
    %1079 = vmatpush2.bf16.msra.mxu0 0
    %1080 = vmatprep.subr.bf16.mxu0 0
    %1081 = vmatpush2.bf16.msra.mxu0 0
    %1082 = vmatprep.subr.bf16.mxu0 0
    %1083 = vmatpush2.bf16.msra.mxu0 0
    %1084 = vmatprep.subr.bf16.mxu0 0
    %1085 = vmatpush2.bf16.msra.mxu0 0
    %1086 = vmatprep.subr.bf16.mxu0 0
    %1087 = vmatpush2.bf16.msra.mxu0 0
    %1088 = vmatprep.subr.bf16.mxu0 0
    %1089 = vmatpush2.bf16.msra.mxu0 0
    %1090 = vmatprep.subr.bf16.mxu0 0
    %1091 = vmatpush2.bf16.msra.mxu0 0
    %1092 = vmatprep.mubr.bf16.mxu0 0
    %1093 = vmatmul.mubr.bf16.gmra.mxu0 %v1018
    %v1094 = vpop.f32.mrf.mxu0
    %v1095 = vadd.f32 0.0, %v1094
    %v1096 = vpop.f32.mrf.mxu0
    %v1097 = vadd.f32 0.0, %v1096
    %v1098 = vpop.f32.mrf.mxu0
    %v1099 = vpop.f32.mrf.mxu0
    %1100 = vdwg.mxu0
    %v1101 = vadd.f32 %v1014, %v1054
    %v1102 = vadd.f32 %v1015, %v1056
    %v1103 = vadd.f32 %v1016, %v1095
    %v1104 = vadd.f32 %v1017, %v1097
    %v1105 = vmul.f32 %v1101, 0.5
    %v1106 = vmul.f32 %v1102, 0.5
    %v1107 = vmul.f32 %v1103, 0.5
    %v1108 = vtanh.pop %v1105
    %v1109 = vtanh.pop %v1106
    %v1110 = vtanh.pop %v1107
    %v1111 = vadd.f32 %v1108, 1.0
    %v1112 = vadd.f32 %v1109, 1.0
    %v1113 = vadd.f32 %v1110, 1.0
    %v1114 = vmul.f32 %v1111, 0.5
    %v1115 = vmul.f32 %v1112, 0.5
    %v1116 = vmul.f32 %v1113, 0.5
    %v1117 = vtanh.pop %v1104
    %v1118 = vmul.f32 %v1115, %v1008
    %v1119 = vmul.f32 %v1114, %v1117
    %v1120 = vadd.f32 %v1118, %v1119
    %v1121 = vtanh.pop %v1120
    %v1122 = vmul.f32 %v1116, %v1121
    %s1123 = smul.u32 4, 4
    %s1124 = smul.addr %s1123, 8
    %s1125 = scalar_lea.vmem [#allocation2], %s1124
    %v1126 = vld [vmem:[%s1125] sm:$0xff]
    %v1127 = vld [vmem:[%s1125 + $0x8] sm:$0xff]
    %v1128 = vld [vmem:[%s1125 + $0x10] sm:$0xff]
    %v1129 = vld [vmem:[%s1125 + $0x18] sm:$0xff]
    %v1130 = vpack.c.bf16 %v1122, %v1122
    %1131 = vmatprep.subr.bf16.mxu0 %v648
    %1132 = vmatpush1.bf16.msra.mxu0 %v647
    %1133 = vmatprep.subr.bf16.mxu0 %v644
    %1134 = vmatpush1.bf16.msra.mxu0 %v643
    %1135 = vmatprep.subr.bf16.mxu0 %v640
    %1136 = vmatpush1.bf16.msra.mxu0 %v639
    %1137 = vmatprep.subr.bf16.mxu0 %v636
    %1138 = vmatpush1.bf16.msra.mxu0 %v635
    %1139 = vmatprep.subr.bf16.mxu0 %v632
    %1140 = vmatpush1.bf16.msra.mxu0 %v631
    %1141 = vmatprep.subr.bf16.mxu0 %v628
    %1142 = vmatpush1.bf16.msra.mxu0 %v627
    %1143 = vmatprep.subr.bf16.mxu0 %v624
    %1144 = vmatpush1.bf16.msra.mxu0 %v623
    %1145 = vmatprep.subr.bf16.mxu0 %v620
    %1146 = vmatpush1.bf16.msra.mxu0 %v619
    %1147 = vmatprep.subr.bf16.mxu0 0
    %1148 = vmatpush2.bf16.msra.mxu0 0
    %1149 = vmatprep.subr.bf16.mxu0 0
    %1150 = vmatpush2.bf16.msra.mxu0 0
    %1151 = vmatprep.subr.bf16.mxu0 0
    %1152 = vmatpush2.bf16.msra.mxu0 0
    %1153 = vmatprep.subr.bf16.mxu0 0
    %1154 = vmatpush2.bf16.msra.mxu0 0
    %1155 = vmatprep.subr.bf16.mxu0 0
    %1156 = vmatpush2.bf16.msra.mxu0 0
    %1157 = vmatprep.subr.bf16.mxu0 0
    %1158 = vmatpush2.bf16.msra.mxu0 0
    %1159 = vmatprep.subr.bf16.mxu0 0
    %1160 = vmatpush2.bf16.msra.mxu0 0
    %1161 = vmatprep.subr.bf16.mxu0 0
    %1162 = vmatpush2.bf16.msra.mxu0 0
    %1163 = vmatprep.mubr.bf16.mxu0 0
    %1164 = vmatmul.mubr.bf16.gmra.mxu0 %v1130
    %v1165 = vpop.f32.mrf.mxu0
    %v1166 = vadd.f32 0.0, %v1165
    %v1167 = vpop.f32.mrf.mxu0
    %v1168 = vadd.f32 0.0, %v1167
    %v1169 = vpop.f32.mrf.mxu0
    %v1170 = vpop.f32.mrf.mxu0
    %1171 = vdwg.mxu0
    %1172 = vmatprep.subr.bf16.mxu0 %v650
    %1173 = vmatpush1.bf16.msra.mxu0 %v649
    %1174 = vmatprep.subr.bf16.mxu0 %v646
    %1175 = vmatpush1.bf16.msra.mxu0 %v645
    %1176 = vmatprep.subr.bf16.mxu0 %v642
    %1177 = vmatpush1.bf16.msra.mxu0 %v641
    %1178 = vmatprep.subr.bf16.mxu0 %v638
    %1179 = vmatpush1.bf16.msra.mxu0 %v637
    %1180 = vmatprep.subr.bf16.mxu0 %v634
    %1181 = vmatpush1.bf16.msra.mxu0 %v633
    %1182 = vmatprep.subr.bf16.mxu0 %v630
    %1183 = vmatpush1.bf16.msra.mxu0 %v629
    %1184 = vmatprep.subr.bf16.mxu0 %v626
    %1185 = vmatpush1.bf16.msra.mxu0 %v625
    %1186 = vmatprep.subr.bf16.mxu0 %v622
    %1187 = vmatpush1.bf16.msra.mxu0 %v621
    %1188 = vmatprep.subr.bf16.mxu0 0
    %1189 = vmatpush2.bf16.msra.mxu0 0
    %1190 = vmatprep.subr.bf16.mxu0 0
    %1191 = vmatpush2.bf16.msra.mxu0 0
    %1192 = vmatprep.subr.bf16.mxu0 0
    %1193 = vmatpush2.bf16.msra.mxu0 0
    %1194 = vmatprep.subr.bf16.mxu0 0
    %1195 = vmatpush2.bf16.msra.mxu0 0
    %1196 = vmatprep.subr.bf16.mxu0 0
    %1197 = vmatpush2.bf16.msra.mxu0 0
    %1198 = vmatprep.subr.bf16.mxu0 0
    %1199 = vmatpush2.bf16.msra.mxu0 0
    %1200 = vmatprep.subr.bf16.mxu0 0
    %1201 = vmatpush2.bf16.msra.mxu0 0
    %1202 = vmatprep.subr.bf16.mxu0 0
    %1203 = vmatpush2.bf16.msra.mxu0 0
    %1204 = vmatprep.mubr.bf16.mxu0 0
    %1205 = vmatmul.mubr.bf16.gmra.mxu0 %v1130
    %v1206 = vpop.f32.mrf.mxu0
    %v1207 = vadd.f32 0.0, %v1206
    %v1208 = vpop.f32.mrf.mxu0
    %v1209 = vadd.f32 0.0, %v1208
    %v1210 = vpop.f32.mrf.mxu0
    %v1211 = vpop.f32.mrf.mxu0
    %1212 = vdwg.mxu0
    %v1213 = vadd.f32 %v1126, %v1166
    %v1214 = vadd.f32 %v1127, %v1168
    %v1215 = vadd.f32 %v1128, %v1207
    %v1216 = vadd.f32 %v1129, %v1209
    %v1217 = vmul.f32 %v1213, 0.5
    %v1218 = vmul.f32 %v1214, 0.5
    %v1219 = vmul.f32 %v1215, 0.5
    %v1220 = vtanh.pop %v1217
    %v1221 = vtanh.pop %v1218
    %v1222 = vtanh.pop %v1219
    %v1223 = vadd.f32 %v1220, 1.0
    %v1224 = vadd.f32 %v1221, 1.0
    %v1225 = vadd.f32 %v1222, 1.0
    %v1226 = vmul.f32 %v1223, 0.5
    %v1227 = vmul.f32 %v1224, 0.5
    %v1228 = vmul.f32 %v1225, 0.5
    %v1229 = vtanh.pop %v1216
    %v1230 = vmul.f32 %v1227, %v1120
    %v1231 = vmul.f32 %v1226, %v1229
    %v1232 = vadd.f32 %v1230, %v1231
    %v1233 = vtanh.pop %v1232
    %v1234 = vmul.f32 %v1228, %v1233
    %s1235 = smul.u32 5, 4
    %s1236 = smul.addr %s1235, 8
    %s1237 = scalar_lea.vmem [#allocation2], %s1236
    %v1238 = vld [vmem:[%s1237] sm:$0xff]
    %v1239 = vld [vmem:[%s1237 + $0x8] sm:$0xff]
    %v1240 = vld [vmem:[%s1237 + $0x10] sm:$0xff]
    %v1241 = vld [vmem:[%s1237 + $0x18] sm:$0xff]
    %v1242 = vpack.c.bf16 %v1234, %v1234
    %1243 = vmatprep.subr.bf16.mxu0 %v648
    %1244 = vmatpush1.bf16.msra.mxu0 %v647
    %1245 = vmatprep.subr.bf16.mxu0 %v644
    %1246 = vmatpush1.bf16.msra.mxu0 %v643
    %1247 = vmatprep.subr.bf16.mxu0 %v640
    %1248 = vmatpush1.bf16.msra.mxu0 %v639
    %1249 = vmatprep.subr.bf16.mxu0 %v636
    %1250 = vmatpush1.bf16.msra.mxu0 %v635
    %1251 = vmatprep.subr.bf16.mxu0 %v632
    %1252 = vmatpush1.bf16.msra.mxu0 %v631
    %1253 = vmatprep.subr.bf16.mxu0 %v628
    %1254 = vmatpush1.bf16.msra.mxu0 %v627
    %1255 = vmatprep.subr.bf16.mxu0 %v624
    %1256 = vmatpush1.bf16.msra.mxu0 %v623
    %1257 = vmatprep.subr.bf16.mxu0 %v620
    %1258 = vmatpush1.bf16.msra.mxu0 %v619
    %1259 = vmatprep.subr.bf16.mxu0 0
    %1260 = vmatpush2.bf16.msra.mxu0 0
    %1261 = vmatprep.subr.bf16.mxu0 0
    %1262 = vmatpush2.bf16.msra.mxu0 0
    %1263 = vmatprep.subr.bf16.mxu0 0
    %1264 = vmatpush2.bf16.msra.mxu0 0
    %1265 = vmatprep.subr.bf16.mxu0 0
    %1266 = vmatpush2.bf16.msra.mxu0 0
    %1267 = vmatprep.subr.bf16.mxu0 0
    %1268 = vmatpush2.bf16.msra.mxu0 0
    %1269 = vmatprep.subr.bf16.mxu0 0
    %1270 = vmatpush2.bf16.msra.mxu0 0
    %1271 = vmatprep.subr.bf16.mxu0 0
    %1272 = vmatpush2.bf16.msra.mxu0 0
    %1273 = vmatprep.subr.bf16.mxu0 0
    %1274 = vmatpush2.bf16.msra.mxu0 0
    %1275 = vmatprep.mubr.bf16.mxu0 0
    %1276 = vmatmul.mubr.bf16.gmra.mxu0 %v1242
    %v1277 = vpop.f32.mrf.mxu0
    %v1278 = vadd.f32 0.0, %v1277
    %v1279 = vpop.f32.mrf.mxu0
    %v1280 = vadd.f32 0.0, %v1279
    %v1281 = vpop.f32.mrf.mxu0
    %v1282 = vpop.f32.mrf.mxu0
    %1283 = vdwg.mxu0
    %1284 = vmatprep.subr.bf16.mxu0 %v650
    %1285 = vmatpush1.bf16.msra.mxu0 %v649
    %1286 = vmatprep.subr.bf16.mxu0 %v646
    %1287 = vmatpush1.bf16.msra.mxu0 %v645
    %1288 = vmatprep.subr.bf16.mxu0 %v642
    %1289 = vmatpush1.bf16.msra.mxu0 %v641
    %1290 = vmatprep.subr.bf16.mxu0 %v638
    %1291 = vmatpush1.bf16.msra.mxu0 %v637
    %1292 = vmatprep.subr.bf16.mxu0 %v634
    %1293 = vmatpush1.bf16.msra.mxu0 %v633
    %1294 = vmatprep.subr.bf16.mxu0 %v630
    %1295 = vmatpush1.bf16.msra.mxu0 %v629
    %1296 = vmatprep.subr.bf16.mxu0 %v626
    %1297 = vmatpush1.bf16.msra.mxu0 %v625
    %1298 = vmatprep.subr.bf16.mxu0 %v622
    %1299 = vmatpush1.bf16.msra.mxu0 %v621
    %1300 = vmatprep.subr.bf16.mxu0 0
    %1301 = vmatpush2.bf16.msra.mxu0 0
    %1302 = vmatprep.subr.bf16.mxu0 0
    %1303 = vmatpush2.bf16.msra.mxu0 0
    %1304 = vmatprep.subr.bf16.mxu0 0
    %1305 = vmatpush2.bf16.msra.mxu0 0
    %1306 = vmatprep.subr.bf16.mxu0 0
    %1307 = vmatpush2.bf16.msra.mxu0 0
    %1308 = vmatprep.subr.bf16.mxu0 0
    %1309 = vmatpush2.bf16.msra.mxu0 0
    %1310 = vmatprep.subr.bf16.mxu0 0
    %1311 = vmatpush2.bf16.msra.mxu0 0
    %1312 = vmatprep.subr.bf16.mxu0 0
    %1313 = vmatpush2.bf16.msra.mxu0 0
    %1314 = vmatprep.subr.bf16.mxu0 0
    %1315 = vmatpush2.bf16.msra.mxu0 0
    %1316 = vmatprep.mubr.bf16.mxu0 0
    %1317 = vmatmul.mubr.bf16.gmra.mxu0 %v1242
    %v1318 = vpop.f32.mrf.mxu0
    %v1319 = vadd.f32 0.0, %v1318
    %v1320 = vpop.f32.mrf.mxu0
    %v1321 = vadd.f32 0.0, %v1320
    %v1322 = vpop.f32.mrf.mxu0
    %v1323 = vpop.f32.mrf.mxu0
    %1324 = vdwg.mxu0
    %v1325 = vadd.f32 %v1238, %v1278
    %v1326 = vadd.f32 %v1239, %v1280
    %v1327 = vadd.f32 %v1240, %v1319
    %v1328 = vadd.f32 %v1241, %v1321
    %v1329 = vmul.f32 %v1325, 0.5
    %v1330 = vmul.f32 %v1326, 0.5
    %v1331 = vmul.f32 %v1327, 0.5
    %v1332 = vtanh.pop %v1329
    %v1333 = vtanh.pop %v1330
    %v1334 = vtanh.pop %v1331
    %v1335 = vadd.f32 %v1332, 1.0
    %v1336 = vadd.f32 %v1333, 1.0
    %v1337 = vadd.f32 %v1334, 1.0
    %v1338 = vmul.f32 %v1335, 0.5
    %v1339 = vmul.f32 %v1336, 0.5
    %v1340 = vmul.f32 %v1337, 0.5
    %v1341 = vtanh.pop %v1328
    %v1342 = vmul.f32 %v1339, %v1232
    %v1343 = vmul.f32 %v1338, %v1341
    %v1344 = vadd.f32 %v1342, %v1343
    %v1345 = vtanh.pop %v1344
    %v1346 = vmul.f32 %v1340, %v1345
    %s1347 = smul.u32 6, 4
    %s1348 = smul.addr %s1347, 8
    %s1349 = scalar_lea.vmem [#allocation2], %s1348
    %v1350 = vld [vmem:[%s1349] sm:$0xff]
    %v1351 = vld [vmem:[%s1349 + $0x8] sm:$0xff]
    %v1352 = vld [vmem:[%s1349 + $0x10] sm:$0xff]
    %v1353 = vld [vmem:[%s1349 + $0x18] sm:$0xff]
    %v1354 = vpack.c.bf16 %v1346, %v1346
    %1355 = vmatprep.subr.bf16.mxu0 %v648
    %1356 = vmatpush1.bf16.msra.mxu0 %v647
    %1357 = vmatprep.subr.bf16.mxu0 %v644
    %1358 = vmatpush1.bf16.msra.mxu0 %v643
    %1359 = vmatprep.subr.bf16.mxu0 %v640
    %1360 = vmatpush1.bf16.msra.mxu0 %v639
    %1361 = vmatprep.subr.bf16.mxu0 %v636
    %1362 = vmatpush1.bf16.msra.mxu0 %v635
    %1363 = vmatprep.subr.bf16.mxu0 %v632
    %1364 = vmatpush1.bf16.msra.mxu0 %v631
    %1365 = vmatprep.subr.bf16.mxu0 %v628
    %1366 = vmatpush1.bf16.msra.mxu0 %v627
    %1367 = vmatprep.subr.bf16.mxu0 %v624
    %1368 = vmatpush1.bf16.msra.mxu0 %v623
    %1369 = vmatprep.subr.bf16.mxu0 %v620
    %1370 = vmatpush1.bf16.msra.mxu0 %v619
    %1371 = vmatprep.subr.bf16.mxu0 0
    %1372 = vmatpush2.bf16.msra.mxu0 0
    %1373 = vmatprep.subr.bf16.mxu0 0
    %1374 = vmatpush2.bf16.msra.mxu0 0
    %1375 = vmatprep.subr.bf16.mxu0 0
    %1376 = vmatpush2.bf16.msra.mxu0 0
    %1377 = vmatprep.subr.bf16.mxu0 0
    %1378 = vmatpush2.bf16.msra.mxu0 0
    %1379 = vmatprep.subr.bf16.mxu0 0
    %1380 = vmatpush2.bf16.msra.mxu0 0
    %1381 = vmatprep.subr.bf16.mxu0 0
    %1382 = vmatpush2.bf16.msra.mxu0 0
    %1383 = vmatprep.subr.bf16.mxu0 0
    %1384 = vmatpush2.bf16.msra.mxu0 0
    %1385 = vmatprep.subr.bf16.mxu0 0
    %1386 = vmatpush2.bf16.msra.mxu0 0
    %1387 = vmatprep.mubr.bf16.mxu0 0
    %1388 = vmatmul.mubr.bf16.gmra.mxu0 %v1354
    %v1389 = vpop.f32.mrf.mxu0
    %v1390 = vadd.f32 0.0, %v1389
    %v1391 = vpop.f32.mrf.mxu0
    %v1392 = vadd.f32 0.0, %v1391
    %v1393 = vpop.f32.mrf.mxu0
    %v1394 = vpop.f32.mrf.mxu0
    %1395 = vdwg.mxu0
    %1396 = vmatprep.subr.bf16.mxu0 %v650
    %1397 = vmatpush1.bf16.msra.mxu0 %v649
    %1398 = vmatprep.subr.bf16.mxu0 %v646
    %1399 = vmatpush1.bf16.msra.mxu0 %v645
    %1400 = vmatprep.subr.bf16.mxu0 %v642
    %1401 = vmatpush1.bf16.msra.mxu0 %v641
    %1402 = vmatprep.subr.bf16.mxu0 %v638
    %1403 = vmatpush1.bf16.msra.mxu0 %v637
    %1404 = vmatprep.subr.bf16.mxu0 %v634
    %1405 = vmatpush1.bf16.msra.mxu0 %v633
    %1406 = vmatprep.subr.bf16.mxu0 %v630
    %1407 = vmatpush1.bf16.msra.mxu0 %v629
    %1408 = vmatprep.subr.bf16.mxu0 %v626
    %1409 = vmatpush1.bf16.msra.mxu0 %v625
    %1410 = vmatprep.subr.bf16.mxu0 %v622
    %1411 = vmatpush1.bf16.msra.mxu0 %v621
    %1412 = vmatprep.subr.bf16.mxu0 0
    %1413 = vmatpush2.bf16.msra.mxu0 0
    %1414 = vmatprep.subr.bf16.mxu0 0
    %1415 = vmatpush2.bf16.msra.mxu0 0
    %1416 = vmatprep.subr.bf16.mxu0 0
    %1417 = vmatpush2.bf16.msra.mxu0 0
    %1418 = vmatprep.subr.bf16.mxu0 0
    %1419 = vmatpush2.bf16.msra.mxu0 0
    %1420 = vmatprep.subr.bf16.mxu0 0
    %1421 = vmatpush2.bf16.msra.mxu0 0
    %1422 = vmatprep.subr.bf16.mxu0 0
    %1423 = vmatpush2.bf16.msra.mxu0 0
    %1424 = vmatprep.subr.bf16.mxu0 0
    %1425 = vmatpush2.bf16.msra.mxu0 0
    %1426 = vmatprep.subr.bf16.mxu0 0
    %1427 = vmatpush2.bf16.msra.mxu0 0
    %1428 = vmatprep.mubr.bf16.mxu0 0
    %1429 = vmatmul.mubr.bf16.gmra.mxu0 %v1354
    %v1430 = vpop.f32.mrf.mxu0
    %v1431 = vadd.f32 0.0, %v1430
    %v1432 = vpop.f32.mrf.mxu0
    %v1433 = vadd.f32 0.0, %v1432
    %v1434 = vpop.f32.mrf.mxu0
    %v1435 = vpop.f32.mrf.mxu0
    %1436 = vdwg.mxu0
    %v1437 = vadd.f32 %v1350, %v1390
    %v1438 = vadd.f32 %v1351, %v1392
    %v1439 = vadd.f32 %v1352, %v1431
    %v1440 = vadd.f32 %v1353, %v1433
    %v1441 = vmul.f32 %v1437, 0.5
    %v1442 = vmul.f32 %v1438, 0.5
    %v1443 = vmul.f32 %v1439, 0.5
    %v1444 = vtanh.pop %v1441
    %v1445 = vtanh.pop %v1442
    %v1446 = vtanh.pop %v1443
    %v1447 = vadd.f32 %v1444, 1.0
    %v1448 = vadd.f32 %v1445, 1.0
    %v1449 = vadd.f32 %v1446, 1.0
    %v1450 = vmul.f32 %v1447, 0.5
    %v1451 = vmul.f32 %v1448, 0.5
    %v1452 = vmul.f32 %v1449, 0.5
    %v1453 = vtanh.pop %v1440
    %v1454 = vmul.f32 %v1451, %v1344
    %v1455 = vmul.f32 %v1450, %v1453
    %v1456 = vadd.f32 %v1454, %v1455
    %v1457 = vtanh.pop %v1456
    %v1458 = vmul.f32 %v1452, %v1457
    %s1459 = smul.u32 7, 4
    %s1460 = smul.addr %s1459, 8
    %s1461 = scalar_lea.vmem [#allocation2], %s1460
    %v1462 = vld [vmem:[%s1461] sm:$0xff]
    %v1463 = vld [vmem:[%s1461 + $0x8] sm:$0xff]
    %v1464 = vld [vmem:[%s1461 + $0x10] sm:$0xff]
    %v1465 = vld [vmem:[%s1461 + $0x18] sm:$0xff]
    %v1466 = vpack.c.bf16 %v1458, %v1458
    %1467 = vmatprep.subr.bf16.mxu0 %v648
    %1468 = vmatpush1.bf16.msra.mxu0 %v647
    %1469 = vmatprep.subr.bf16.mxu0 %v644
    %1470 = vmatpush1.bf16.msra.mxu0 %v643
    %1471 = vmatprep.subr.bf16.mxu0 %v640
    %1472 = vmatpush1.bf16.msra.mxu0 %v639
    %1473 = vmatprep.subr.bf16.mxu0 %v636
    %1474 = vmatpush1.bf16.msra.mxu0 %v635
    %1475 = vmatprep.subr.bf16.mxu0 %v632
    %1476 = vmatpush1.bf16.msra.mxu0 %v631
    %1477 = vmatprep.subr.bf16.mxu0 %v628
    %1478 = vmatpush1.bf16.msra.mxu0 %v627
    %1479 = vmatprep.subr.bf16.mxu0 %v624
    %1480 = vmatpush1.bf16.msra.mxu0 %v623
    %1481 = vmatprep.subr.bf16.mxu0 %v620
    %1482 = vmatpush1.bf16.msra.mxu0 %v619
    %1483 = vmatprep.subr.bf16.mxu0 0
    %1484 = vmatpush2.bf16.msra.mxu0 0
    %1485 = vmatprep.subr.bf16.mxu0 0
    %1486 = vmatpush2.bf16.msra.mxu0 0
    %1487 = vmatprep.subr.bf16.mxu0 0
    %1488 = vmatpush2.bf16.msra.mxu0 0
    %1489 = vmatprep.subr.bf16.mxu0 0
    %1490 = vmatpush2.bf16.msra.mxu0 0
    %1491 = vmatprep.subr.bf16.mxu0 0
    %1492 = vmatpush2.bf16.msra.mxu0 0
    %1493 = vmatprep.subr.bf16.mxu0 0
    %1494 = vmatpush2.bf16.msra.mxu0 0
    %1495 = vmatprep.subr.bf16.mxu0 0
    %1496 = vmatpush2.bf16.msra.mxu0 0
    %1497 = vmatprep.subr.bf16.mxu0 0
    %1498 = vmatpush2.bf16.msra.mxu0 0
    %1499 = vmatprep.mubr.bf16.mxu0 0
    %1500 = vmatmul.mubr.bf16.gmra.mxu0 %v1466
    %v1501 = vpop.f32.mrf.mxu0
    %v1502 = vadd.f32 0.0, %v1501
    %v1503 = vpop.f32.mrf.mxu0
    %v1504 = vadd.f32 0.0, %v1503
    %v1505 = vpop.f32.mrf.mxu0
    %v1506 = vpop.f32.mrf.mxu0
    %1507 = vdwg.mxu0
    %1508 = vmatprep.subr.bf16.mxu0 %v650
    %1509 = vmatpush1.bf16.msra.mxu0 %v649
    %1510 = vmatprep.subr.bf16.mxu0 %v646
    %1511 = vmatpush1.bf16.msra.mxu0 %v645
    %1512 = vmatprep.subr.bf16.mxu0 %v642
    %1513 = vmatpush1.bf16.msra.mxu0 %v641
    %1514 = vmatprep.subr.bf16.mxu0 %v638
    %1515 = vmatpush1.bf16.msra.mxu0 %v637
    %1516 = vmatprep.subr.bf16.mxu0 %v634
    %1517 = vmatpush1.bf16.msra.mxu0 %v633
    %1518 = vmatprep.subr.bf16.mxu0 %v630
    %1519 = vmatpush1.bf16.msra.mxu0 %v629
    %1520 = vmatprep.subr.bf16.mxu0 %v626
    %1521 = vmatpush1.bf16.msra.mxu0 %v625
    %1522 = vmatprep.subr.bf16.mxu0 %v622
    %1523 = vmatpush1.bf16.msra.mxu0 %v621
    %1524 = vmatprep.subr.bf16.mxu0 0
    %1525 = vmatpush2.bf16.msra.mxu0 0
    %1526 = vmatprep.subr.bf16.mxu0 0
    %1527 = vmatpush2.bf16.msra.mxu0 0
    %1528 = vmatprep.subr.bf16.mxu0 0
    %1529 = vmatpush2.bf16.msra.mxu0 0
    %1530 = vmatprep.subr.bf16.mxu0 0
    %1531 = vmatpush2.bf16.msra.mxu0 0
    %1532 = vmatprep.subr.bf16.mxu0 0
    %1533 = vmatpush2.bf16.msra.mxu0 0
    %1534 = vmatprep.subr.bf16.mxu0 0
    %1535 = vmatpush2.bf16.msra.mxu0 0
    %1536 = vmatprep.subr.bf16.mxu0 0
    %1537 = vmatpush2.bf16.msra.mxu0 0
    %1538 = vmatprep.subr.bf16.mxu0 0
    %1539 = vmatpush2.bf16.msra.mxu0 0
    %1540 = vmatprep.mubr.bf16.mxu0 0
    %1541 = vmatmul.mubr.bf16.gmra.mxu0 %v1466
    %v1542 = vpop.f32.mrf.mxu0
    %v1543 = vadd.f32 0.0, %v1542
    %v1544 = vpop.f32.mrf.mxu0
    %v1545 = vadd.f32 0.0, %v1544
    %v1546 = vpop.f32.mrf.mxu0
    %v1547 = vpop.f32.mrf.mxu0
    %1548 = vdwg.mxu0
    %v1549 = vadd.f32 %v1462, %v1502
    %v1550 = vadd.f32 %v1463, %v1504
    %v1551 = vadd.f32 %v1464, %v1543
    %v1552 = vadd.f32 %v1465, %v1545
    %v1553 = vmul.f32 %v1549, 0.5
    %v1554 = vmul.f32 %v1550, 0.5
    %v1555 = vmul.f32 %v1551, 0.5
    %v1556 = vtanh.pop %v1553
    %v1557 = vtanh.pop %v1554
    %v1558 = vtanh.pop %v1555
    %v1559 = vadd.f32 %v1556, 1.0
    %v1560 = vadd.f32 %v1557, 1.0
    %v1561 = vadd.f32 %v1558, 1.0
    %v1562 = vmul.f32 %v1559, 0.5
    %v1563 = vmul.f32 %v1560, 0.5
    %v1564 = vmul.f32 %v1561, 0.5
    %v1565 = vtanh.pop %v1552
    %v1566 = vmul.f32 %v1563, %v1456
    %v1567 = vmul.f32 %v1562, %v1565
    %v1568 = vadd.f32 %v1566, %v1567
    %v1569 = vtanh.pop %v1568
    %v1570 = vmul.f32 %v1564, %v1569
    %v1571 = vpack.c.bf16 %v1570, %v1570
    %v1572 = vld [vmem:[%s4] sm:$0xf]
    %v1573 = vld [vmem:[%s4 + $0x4] sm:$0xf]
    %v1574 = vld [vmem:[%s4 + $0x8] sm:$0xf]
    %v1575 = vld [vmem:[%s4 + $0xc] sm:$0xf]
    %v1576 = vld [vmem:[%s4 + $0x10] sm:$0xf]
    %v1577 = vld [vmem:[%s4 + $0x14] sm:$0xf]
    %v1578 = vld [vmem:[%s4 + $0x18] sm:$0xf]
    %v1579 = vld [vmem:[%s4 + $0x1c] sm:$0xf]
    %v1580 = vld [vmem:[%s4 + $0x20] sm:$0xf]
    %v1581 = vld [vmem:[%s4 + $0x24] sm:$0xf]
    %v1582 = vld [vmem:[%s4 + $0x28] sm:$0xf]
    %v1583 = vld [vmem:[%s4 + $0x2c] sm:$0xf]
    %v1584 = vld [vmem:[%s4 + $0x30] sm:$0xf]
    %v1585 = vld [vmem:[%s4 + $0x34] sm:$0xf]
    %v1586 = vld [vmem:[%s4 + $0x38] sm:$0xf]
    %v1587 = vld [vmem:[%s4 + $0x3c] sm:$0xf]
    %v1588 = vld [vmem:[%s5] sm:$0x1]
    %v1590 = vlaneseq
    %v1591 = vshrl.u32 %v1590, 7
    %v1592 = vsub.s32 0, %v1591
    %v1593 = vrot.slane %v1588, %v1592
    %v1611 = vunpack.c.l.b16 %v1572
    %v1612 = vunpack.c.l.b16 %v1573
    %v1613 = vunpack.c.l.b16 %v1574
    %v1614 = vunpack.c.l.b16 %v1575
    %v1615 = vunpack.c.l.b16 %v1576
    %v1616 = vunpack.c.l.b16 %v1577
    %v1617 = vunpack.c.l.b16 %v1578
    %v1618 = vunpack.c.l.b16 %v1579
    %v1619 = vunpack.c.l.b16 %v1580
    %v1620 = vunpack.c.l.b16 %v1581
    %v1621 = vunpack.c.l.b16 %v1582
    %v1622 = vunpack.c.l.b16 %v1583
    %v1623 = vunpack.c.l.b16 %v1584
    %v1624 = vunpack.c.l.b16 %v1585
    %v1625 = vunpack.c.l.b16 %v1586
    %v1626 = vunpack.c.l.b16 %v1587
    %v1627 = vpack.c.b16 %v1612, %v1611
    %v1628 = vpack.c.b16 %v1614, %v1613
    %v1629 = vpack.c.b16 %v1616, %v1615
    %v1630 = vpack.c.b16 %v1618, %v1617
    %v1631 = vpack.c.b16 %v1620, %v1619
    %v1632 = vpack.c.b16 %v1622, %v1621
    %v1633 = vpack.c.b16 %v1624, %v1623
    %v1634 = vpack.c.b16 %v1626, %v1625
    %1643 = vmatprep.subr.bf16.mxu0 0
    %1644 = vmatpush1.bf16.msra.mxu0 %v1634
    %1645 = vmatprep.subr.bf16.mxu0 0
    %1646 = vmatpush1.bf16.msra.mxu0 %v1633
    %1647 = vmatprep.subr.bf16.mxu0 0
    %1648 = vmatpush1.bf16.msra.mxu0 %v1632
    %1649 = vmatprep.subr.bf16.mxu0 0
    %1650 = vmatpush1.bf16.msra.mxu0 %v1631
    %1651 = vmatprep.subr.bf16.mxu0 0
    %1652 = vmatpush1.bf16.msra.mxu0 %v1630
    %1653 = vmatprep.subr.bf16.mxu0 0
    %1654 = vmatpush1.bf16.msra.mxu0 %v1629
    %1655 = vmatprep.subr.bf16.mxu0 0
    %1656 = vmatpush1.bf16.msra.mxu0 %v1628
    %1657 = vmatprep.subr.bf16.mxu0 0
    %1658 = vmatpush1.bf16.msra.mxu0 %v1627
    %1659 = vmatprep.subr.bf16.mxu0 0
    %1660 = vmatpush2.bf16.msra.mxu0 0
    %1661 = vmatprep.subr.bf16.mxu0 0
    %1662 = vmatpush2.bf16.msra.mxu0 0
    %1663 = vmatprep.subr.bf16.mxu0 0
    %1664 = vmatpush2.bf16.msra.mxu0 0
    %1665 = vmatprep.subr.bf16.mxu0 0
    %1666 = vmatpush2.bf16.msra.mxu0 0
    %1667 = vmatprep.subr.bf16.mxu0 0
    %1668 = vmatpush2.bf16.msra.mxu0 0
    %1669 = vmatprep.subr.bf16.mxu0 0
    %1670 = vmatpush2.bf16.msra.mxu0 0
    %1671 = vmatprep.subr.bf16.mxu0 0
    %1672 = vmatpush2.bf16.msra.mxu0 0
    %1673 = vmatprep.subr.bf16.mxu0 0
    %1674 = vmatpush2.bf16.msra.mxu0 0
    %1675 = vmatprep.mubr.bf16.mxu0 0
    %1676 = vmatmul.mubr.bf16.gmra.mxu0 %v1571
    %v1677 = vpop.f32.mrf.mxu0
    %v1678 = vadd.f32 %v1593, %v1677
    %v1679 = vpop.f32.mrf.mxu0
    %v1680 = vpop.f32.mrf.mxu0
    %v1681 = vpop.f32.mrf.mxu0
    %1682 = vdwg.mxu0
    %vm1683 = vcmp.ge.f32.partialorder %v1678, 0.0
    %v1684 = vmul.f32 %v1678, 0.01
    %v1685 = vsel %vm1683, %v1678, %v1684
    %v1686 = vld [vmem:[%s6] sm:$0x1]
    %v1688 = vlaneseq
    %v1689 = vshrl.u32 %v1688, 7
    %v1690 = vsub.s32 0, %v1689
    %v1691 = vrot.slane %v1686, %v1690
    %v1693 = vmul.f32 %v1685, %v1691
    %1694 = vadd.xlane.f32.xlu0 %v1693
    %v1695 = vpop.xlane.xlu0 %1694
    %v1696 = vld [vmem:[#allocation3] sm:$0x1]
    %v1698 = vlaneseq
    %v1699 = vshrl.u32 %v1698, 7
    %v1700 = vsub.s32 0, %v1699
    %v1701 = vrot.slane %v1696, %v1700
    %v1703 = vadd.f32 %v1695, %v1701
    %vm1704 = vcmp.ge.f32.partialorder %v1703, 0.0
    %v1705 = vmul.f32 %v1703, 0.01
    %v1706 = vsel %vm1704, %v1703, %v1705
    %vm1707 = vcmask 7168
    %1708 = vst.msk [vmem:[%s8] sm:$0xff] %vm1707, %v1706
    // Predicated region
    $region42: #{lstm_model_forward.1} parent=1 // pred_check
      _
    $region43: #{lstm_model_forward.1} parent=1 // pred_check_branch
      %1710 = sbr.rel (0) target = $region45
    $region44: #{lstm_model_forward.1} parent=1 // pred_region
      _
    $region45: #{lstm_model_forward.1} parent=1 // pred_fallthru
      _
    // Predicated region
    $region46: #{lstm_model_forward.1} parent=1 // pred_check
      _
    $region47: #{lstm_model_forward.1} parent=1 // pred_check_branch
      %1712 = sbr.rel (0) target = $region49
    $region48: #{lstm_model_forward.1} parent=1 // pred_region
      _
    $region49: #{lstm_model_forward.1} parent=1 // pred_fallthru
      _
    %1713 = vsyncpa [#allocation5], 1
    %1714 = vsyncpa [#allocation7], 1

</llo_original>
